<compile_context>
chip_gen: v5e
topology: v5e:2x2
jax: 0.10.0
libtpu: 0.0.40
codegen_flags: <defaults>
</compile_context>

<pallas_src>
import functools

import jax
import jax.numpy as jnp
from jax.experimental import pallas as pl
from jax.experimental.pallas import tpu as pltpu


def _downsample_band_kernel(x_ref, h_ref, w_ref, b_ref, o_ref):
    # x_ref: (4, Rb, Wo+1, Cp) bf16 -- 2x2 parity planes, body rows of one band
    # h_ref: (2, Wo+1, Cp)     bf16 -- halo row (parity row b*Rb+Rb) of planes 0,1
    # w_ref: (9*Cp, Cp)        bf16 -- HWIO weights flattened as (kh, kw, cin) x cout
    # b_ref: (1, Cp)           f32  -- bias
    # o_ref: (Rb, Wo, Cp)           -- one output row band
    Rb, Wo, Cp = o_ref.shape

    # im2col: tap (kh, kw) is a unit-stride window of parity plane
    # (kh % 2)*2 + (kw % 2), shifted by (kh // 2, kw // 2).
    taps = []
    for kh in range(3):
        rp, dr = kh % 2, kh // 2
        for kw in range(3):
            cpar, dc = kw % 2, kw // 2
            p = rp * 2 + cpar
            if dr == 0:
                tap = x_ref[p, :, dc:dc + Wo, :]                 # (Rb, Wo, Cp)
            else:
                # kh == 2 tap: body rows 1..Rb-1 plus the one halo row.
                halo = h_ref[cpar, dc:dc + Wo, :][None]          # (1, Wo, Cp)
                if Rb > 1:
                    body = x_ref[p, 1:, dc:dc + Wo, :]           # (Rb-1, Wo, Cp)
                    tap = jnp.concatenate([body, halo], axis=0)  # (Rb, Wo, Cp)
                else:
                    tap = halo
            taps.append(tap.reshape(Rb * Wo, Cp))
    patches = jnp.concatenate(taps, axis=-1)                     # (Rb*Wo, 9*Cp)

    # Single MXU pass (bf16 x bf16 -> f32 accumulate), then one bias add.
    acc = jnp.dot(patches, w_ref[...], preferred_element_type=jnp.float32)
    acc = acc + b_ref[...]                                       # (1, Cp) broadcast
    o_ref[...] = acc.reshape(Rb, Wo, Cp).astype(o_ref.dtype)


@functools.partial(jax.jit, static_argnames=("band_rows",))
def downsample_forward(x_nchw, weight_oihw, bias, t=None, *, band_rows=16):
    """Downsample.forward(x, t) with t ignored.  x_nchw: (N, C, H, W)."""
    _ = t
    N, C, H, W = x_nchw.shape
    Ho = (H - 1) // 2 + 1            # output extents of 3x3 / stride 2 / pad 1
    Wo = (W - 1) // 2 + 1
    Cp = -(-C // 128) * 128          # lane-dense channel padding
    Rb = min(band_rows, Ho)          # output rows per grid step
    nb = -(-Ho // Rb)
    Ho_pad = nb * Rb
    Wq = Wo + 1

    # Padded spatial extents: each parity plane is exactly (Ho_pad+1, Wo+1);
    # extra zero rows only feed padded output rows that get sliced away.
    Hp = 2 * (Ho_pad + 1)
    Wp = 2 * Wq

    # NCHW -> NHWC, zero pad, channel pad, bf16 for the MXU (one fused pass).
    x = jnp.transpose(x_nchw, (0, 2, 3, 1)).astype(jnp.bfloat16)
    x = jnp.pad(x, ((0, 0), (1, Hp - 1 - H), (1, Wp - 1 - W), (0, Cp - C)))

    # 2x2 parity split: x[n, 2i+rp, 2j+cp, c] -> xs[n, 2*rp+cp, i, j, c]
    xs = x.reshape(N, Hp // 2, 2, Wp // 2, 2, Cp)
    xs = jnp.transpose(xs, (0, 2, 4, 1, 3, 5)).reshape(N, 4, Ho_pad + 1, Wq, Cp)

    # Per-band halo: parity row (b+1)*Rb of planes 0 and 1 (only the kh==2
    # taps need it).  Tiny array, so no full-input duplication.
    x_halo = xs[:, :2, Rb::Rb]                      # (N, 2, nb, Wq, Cp)

    # OIHW -> HWIO, channel pad, flatten to the (9*Cp, Cp) im2col weight.
    w = jnp.transpose(weight_oihw, (2, 3, 1, 0))
    w = jnp.pad(w, ((0, 0), (0, 0), (0, Cp - C), (0, Cp - C)))
    w_mat = w.reshape(9 * Cp, Cp).astype(jnp.bfloat16)
    b2d = jnp.pad(bias, (0, Cp - C)).reshape(1, Cp).astype(jnp.float32)

    out = pl.pallas_call(
        _downsample_band_kernel,
        out_shape=jax.ShapeDtypeStruct((N, Ho_pad, Wo, Cp), x_nchw.dtype),
        grid_spec=pltpu.PrefetchScalarGridSpec(
            num_scalar_prefetch=0,
            grid=(N, nb),
            in_specs=[
                # Non-overlapping body bands: rows [b*Rb, b*Rb+Rb) of xs.
                pl.BlockSpec((None, 4, Rb, Wq, Cp),
                             lambda n, b: (n, 0, b, 0, 0)),
                # One halo row per band (planes 0 and 1 only).
                pl.BlockSpec((None, 2, None, Wq, Cp),
                             lambda n, b: (n, 0, b, 0, 0)),
                pl.BlockSpec((9 * Cp, Cp), lambda n, b: (0, 0)),  # resident
                pl.BlockSpec((1, Cp), lambda n, b: (0, 0)),       # resident
            ],
            out_specs=pl.BlockSpec((None, Rb, Wo, Cp),
                                   lambda n, b: (n, b, 0, 0)),
        ),
        compiler_params=pltpu.CompilerParams(
            dimension_semantics=("parallel", "parallel"),
            vmem_limit_bytes=48 * 1024 * 1024,
        ),
    )(xs, x_halo, w_mat, b2d)

    # (N, Ho_pad, Wo, Cp) -> (N, Ho, Wo, C) -> NCHW
    out = out[:, :Ho, :, :C]
    return jnp.transpose(out, (0, 3, 1, 2))


if __name__ == "__main__":
    key = jax.random.PRNGKey(0)
    k_x, k_w, k_b = jax.random.split(key, 3)

    N, C, H, W = 2, 4, 16, 16
    x = jax.random.normal(k_x, (N, C, H, W), jnp.float32)

    # Deterministic synthetic parameters (Conv2d(C, C, 3, 3) shapes).
    fan_in = C * 3 * 3
    bound = 1.0 / (fan_in ** 0.5)
    weight = jax.random.uniform(k_w, (C, C, 3, 3), jnp.float32, -bound, bound)
    bias = jax.random.uniform(k_b, (C,), jnp.float32, -bound, bound)

    out = downsample_forward(x, weight, bias)
    out = jax.block_until_ready(out)
    assert out.shape == (N, C, H // 2, W // 2), out.shape

    # Reference: same conv with inputs rounded to bf16 (as the kernel feeds the
    # MXU), f32 accumulation on both sides.
    ref = jax.lax.conv_general_dilated(
        x.astype(jnp.bfloat16).astype(jnp.float32),
        weight.astype(jnp.bfloat16).astype(jnp.float32),
        window_strides=(2, 2),
        padding=((1, 1), (1, 1)),
        dimension_numbers=("NCHW", "OIHW", "NCHW"),
    ) + bias.reshape(1, C, 1, 1)

    max_err = float(jnp.max(jnp.abs(out - ref)))
    assert jnp.allclose(out, ref, atol=2e-2, rtol=2e-2), max_err
    print("KERNEL_OK")
</pallas_src>

<mosaic_0001>
module attributes {stable_mosaic.version = 11 : i64} {
  func.func @_downsample_band_kernel(%arg0: i32, %arg1: i32, %arg2: memref<1x4x8x9x128xbf16, #tpu.memory_space<vmem>>, %arg3: memref<1x2x1x9x128xbf16, #tpu.memory_space<vmem>>, %arg4: memref<1152x128xbf16, #tpu.memory_space<vmem>>, %arg5: memref<1x128xf32, #tpu.memory_space<vmem>>, %arg6: memref<1x8x8x128xf32, #tpu.memory_space<vmem>>) attributes {dimension_semantics = [#tpu.dimension_semantics<parallel>, #tpu.dimension_semantics<parallel>], iteration_bounds = array<i64: 2, 1>, scalar_prefetch = 0 : i64, scratch_operands = 0 : i64, tpu.core_type = #tpu.core_type<tc>, window_params = [{transform_indices = @transform_0, window_bounds = array<i64: 1, 4, 8, 9, 128>}, {transform_indices = @transform_1, window_bounds = array<i64: 1, 2, 1, 9, 128>}, {pipeline_mode = #tpu.pipeline_mode<synchronous>, transform_indices = @transform_2, window_bounds = array<i64: 1152, 128>}, {pipeline_mode = #tpu.pipeline_mode<synchronous>, transform_indices = @transform_3, window_bounds = array<i64: 1, 128>}, {transform_indices = @transform_4, window_bounds = array<i64: 1, 8, 8, 128>}]} {
    %c0 = arith.constant 0 : index
    %c0_0 = arith.constant 0 : index
    %c0_1 = arith.constant 0 : index
    %c0_2 = arith.constant 0 : index
    %c0_3 = arith.constant 0 : index
    %0 = vector.load %arg2[%c0, %c0_0, %c0_1, %c0_2, %c0_3] : memref<1x4x8x9x128xbf16, #tpu.memory_space<vmem>>, vector<1x1x8x8x128xbf16>
    %1 = vector.shape_cast %0 : vector<1x1x8x8x128xbf16> to vector<8x8x128xbf16>
    %2 = vector.shape_cast %1 : vector<8x8x128xbf16> to vector<64x128xbf16>
    %c0_4 = arith.constant 0 : index
    %c1 = arith.constant 1 : index
    %c0_5 = arith.constant 0 : index
    %c0_6 = arith.constant 0 : index
    %c0_7 = arith.constant 0 : index
    %3 = vector.load %arg2[%c0_4, %c1, %c0_5, %c0_6, %c0_7] : memref<1x4x8x9x128xbf16, #tpu.memory_space<vmem>>, vector<1x1x8x8x128xbf16>
    %4 = vector.shape_cast %3 : vector<1x1x8x8x128xbf16> to vector<8x8x128xbf16>
    %5 = vector.shape_cast %4 : vector<8x8x128xbf16> to vector<64x128xbf16>
    %c0_8 = arith.constant 0 : index
    %c0_9 = arith.constant 0 : index
    %c0_10 = arith.constant 0 : index
    %c1_11 = arith.constant 1 : index
    %c0_12 = arith.constant 0 : index
    %6 = vector.load %arg2[%c0_8, %c0_9, %c0_10, %c1_11, %c0_12] : memref<1x4x8x9x128xbf16, #tpu.memory_space<vmem>>, vector<1x1x8x8x128xbf16>
    %7 = vector.shape_cast %6 : vector<1x1x8x8x128xbf16> to vector<8x8x128xbf16>
    %8 = vector.shape_cast %7 : vector<8x8x128xbf16> to vector<64x128xbf16>
    %c0_13 = arith.constant 0 : index
    %c2 = arith.constant 2 : index
    %c0_14 = arith.constant 0 : index
    %c0_15 = arith.constant 0 : index
    %c0_16 = arith.constant 0 : index
    %9 = vector.load %arg2[%c0_13, %c2, %c0_14, %c0_15, %c0_16] : memref<1x4x8x9x128xbf16, #tpu.memory_space<vmem>>, vector<1x1x8x8x128xbf16>
    %10 = vector.shape_cast %9 : vector<1x1x8x8x128xbf16> to vector<8x8x128xbf16>
    %11 = vector.shape_cast %10 : vector<8x8x128xbf16> to vector<64x128xbf16>
    %c0_17 = arith.constant 0 : index
    %c3 = arith.constant 3 : index
    %c0_18 = arith.constant 0 : index
    %c0_19 = arith.constant 0 : index
    %c0_20 = arith.constant 0 : index
    %12 = vector.load %arg2[%c0_17, %c3, %c0_18, %c0_19, %c0_20] : memref<1x4x8x9x128xbf16, #tpu.memory_space<vmem>>, vector<1x1x8x8x128xbf16>
    %13 = vector.shape_cast %12 : vector<1x1x8x8x128xbf16> to vector<8x8x128xbf16>
    %14 = vector.shape_cast %13 : vector<8x8x128xbf16> to vector<64x128xbf16>
    %c0_21 = arith.constant 0 : index
    %c2_22 = arith.constant 2 : index
    %c0_23 = arith.constant 0 : index
    %c1_24 = arith.constant 1 : index
    %c0_25 = arith.constant 0 : index
    %15 = vector.load %arg2[%c0_21, %c2_22, %c0_23, %c1_24, %c0_25] : memref<1x4x8x9x128xbf16, #tpu.memory_space<vmem>>, vector<1x1x8x8x128xbf16>
    %16 = vector.shape_cast %15 : vector<1x1x8x8x128xbf16> to vector<8x8x128xbf16>
    %17 = vector.shape_cast %16 : vector<8x8x128xbf16> to vector<64x128xbf16>
    %c0_26 = arith.constant 0 : index
    %c0_27 = arith.constant 0 : index
    %c0_28 = arith.constant 0 : index
    %c0_29 = arith.constant 0 : index
    %c0_30 = arith.constant 0 : index
    %18 = vector.load %arg3[%c0_26, %c0_27, %c0_28, %c0_29, %c0_30] : memref<1x2x1x9x128xbf16, #tpu.memory_space<vmem>>, vector<1x1x1x8x128xbf16>
    %19 = vector.shape_cast %18 : vector<1x1x1x8x128xbf16> to vector<8x128xbf16>
    %20 = vector.shape_cast %19 : vector<8x128xbf16> to vector<1x8x128xbf16>
    %c0_31 = arith.constant 0 : index
    %c0_32 = arith.constant 0 : index
    %c1_33 = arith.constant 1 : index
    %c0_34 = arith.constant 0 : index
    %c0_35 = arith.constant 0 : index
    %21 = vector.load %arg2[%c0_31, %c0_32, %c1_33, %c0_34, %c0_35] : memref<1x4x8x9x128xbf16, #tpu.memory_space<vmem>>, vector<1x1x7x8x128xbf16>
    %22 = vector.shape_cast %21 : vector<1x1x7x8x128xbf16> to vector<7x8x128xbf16>
    %23 = tpu.concatenate %22, %20 in 0 : vector<7x8x128xbf16>, vector<1x8x128xbf16> -> vector<8x8x128xbf16>
    %24 = vector.shape_cast %23 : vector<8x8x128xbf16> to vector<64x128xbf16>
    %c0_36 = arith.constant 0 : index
    %c1_37 = arith.constant 1 : index
    %c0_38 = arith.constant 0 : index
    %c0_39 = arith.constant 0 : index
    %c0_40 = arith.constant 0 : index
    %25 = vector.load %arg3[%c0_36, %c1_37, %c0_38, %c0_39, %c0_40] : memref<1x2x1x9x128xbf16, #tpu.memory_space<vmem>>, vector<1x1x1x8x128xbf16>
    %26 = vector.shape_cast %25 : vector<1x1x1x8x128xbf16> to vector<8x128xbf16>
    %27 = vector.shape_cast %26 : vector<8x128xbf16> to vector<1x8x128xbf16>
    %c0_41 = arith.constant 0 : index
    %c1_42 = arith.constant 1 : index
    %c1_43 = arith.constant 1 : index
    %c0_44 = arith.constant 0 : index
    %c0_45 = arith.constant 0 : index
    %28 = vector.load %arg2[%c0_41, %c1_42, %c1_43, %c0_44, %c0_45] : memref<1x4x8x9x128xbf16, #tpu.memory_space<vmem>>, vector<1x1x7x8x128xbf16>
    %29 = vector.shape_cast %28 : vector<1x1x7x8x128xbf16> to vector<7x8x128xbf16>
    %30 = tpu.concatenate %29, %27 in 0 : vector<7x8x128xbf16>, vector<1x8x128xbf16> -> vector<8x8x128xbf16>
    %31 = vector.shape_cast %30 : vector<8x8x128xbf16> to vector<64x128xbf16>
    %c0_46 = arith.constant 0 : index
    %c0_47 = arith.constant 0 : index
    %c0_48 = arith.constant 0 : index
    %c1_49 = arith.constant 1 : index
    %c0_50 = arith.constant 0 : index
    %32 = vector.load %arg3[%c0_46, %c0_47, %c0_48, %c1_49, %c0_50] : memref<1x2x1x9x128xbf16, #tpu.memory_space<vmem>>, vector<1x1x1x8x128xbf16>
    %33 = vector.shape_cast %32 : vector<1x1x1x8x128xbf16> to vector<8x128xbf16>
    %34 = vector.shape_cast %33 : vector<8x128xbf16> to vector<1x8x128xbf16>
    %c0_51 = arith.constant 0 : index
    %c0_52 = arith.constant 0 : index
    %c1_53 = arith.constant 1 : index
    %c1_54 = arith.constant 1 : index
    %c0_55 = arith.constant 0 : index
    %35 = vector.load %arg2[%c0_51, %c0_52, %c1_53, %c1_54, %c0_55] : memref<1x4x8x9x128xbf16, #tpu.memory_space<vmem>>, vector<1x1x7x8x128xbf16>
    %36 = vector.shape_cast %35 : vector<1x1x7x8x128xbf16> to vector<7x8x128xbf16>
    %37 = tpu.concatenate %36, %34 in 0 : vector<7x8x128xbf16>, vector<1x8x128xbf16> -> vector<8x8x128xbf16>
    %38 = vector.shape_cast %37 : vector<8x8x128xbf16> to vector<64x128xbf16>
    %39 = tpu.concatenate %2, %5, %8, %11, %14, %17, %24, %31, %38 in 1 : vector<64x128xbf16>, vector<64x128xbf16>, vector<64x128xbf16>, vector<64x128xbf16>, vector<64x128xbf16>, vector<64x128xbf16>, vector<64x128xbf16>, vector<64x128xbf16>, vector<64x128xbf16> -> vector<64x1152xbf16>
    %c0_56 = arith.constant 0 : index
    %c0_57 = arith.constant 0 : index
    %40 = vector.load %arg4[%c0_56, %c0_57] : memref<1152x128xbf16, #tpu.memory_space<vmem>>, vector<1152x128xbf16>
    %cst = arith.constant dense<0.000000e+00> : vector<64x128xf32>
    %41 = tpu.matmul %39, %40, %cst {dimension_numbers = #tpu.dot_dimension_numbers<[1], [0], [0], [1], [0, 0, 1, 1], [], []>} : vector<64x1152xbf16>, vector<1152x128xbf16>, vector<64x128xf32> -> vector<64x128xf32>
    %c0_58 = arith.constant 0 : index
    %c0_59 = arith.constant 0 : index
    %42 = vector.load %arg5[%c0_58, %c0_59] : memref<1x128xf32, #tpu.memory_space<vmem>>, vector<1x128xf32>
    %43 = vector.broadcast %42 : vector<1x128xf32> to vector<64x128xf32>
    %44 = arith.addf %41, %43 : vector<64x128xf32>
    %45 = vector.shape_cast %44 : vector<64x128xf32> to vector<8x8x128xf32>
    %c0_60 = arith.constant 0 : index
    %c0_61 = arith.constant 0 : index
    %c0_62 = arith.constant 0 : index
    %c0_63 = arith.constant 0 : index
    %46 = vector.load %arg6[%c0_60, %c0_61, %c0_62, %c0_63] : memref<1x8x8x128xf32, #tpu.memory_space<vmem>>, vector<1x8x8x128xf32>
    %47 = vector.shape_cast %46 : vector<1x8x8x128xf32> to vector<8x8x128xf32>
    %48 = vector.shape_cast %45 : vector<8x8x128xf32> to vector<1x8x8x128xf32>
    tpu.vector_store %arg6[%c0_60, %c0_61, %c0_62, %c0_63], %48 {strides = array<i32>} : memref<1x8x8x128xf32, #tpu.memory_space<vmem>>, vector<1x8x8x128xf32>,
    return
  }
  func.func @transform_0(%arg0: i32, %arg1: i32) -> (i32, i32, i32, i32, i32) {
    %c0_i32 = arith.constant 0 : i32
    %c0_i32_0 = arith.constant 0 : i32
    %c0_i32_1 = arith.constant 0 : i32
    %c0_i32_2 = arith.constant 0 : i32
    return %arg0, %c0_i32, %arg1, %c0_i32_0, %c0_i32_1 : i32, i32, i32, i32, i32
  }
  func.func @transform_1(%arg0: i32, %arg1: i32) -> (i32, i32, i32, i32, i32) {
    %c0_i32 = arith.constant 0 : i32
    %c0_i32_0 = arith.constant 0 : i32
    %c0_i32_1 = arith.constant 0 : i32
    %c0_i32_2 = arith.constant 0 : i32
    return %arg0, %c0_i32, %arg1, %c0_i32_0, %c0_i32_1 : i32, i32, i32, i32, i32
  }
  func.func @transform_2(%arg0: i32, %arg1: i32) -> (i32, i32) {
    %c0_i32 = arith.constant 0 : i32
    %c0_i32_0 = arith.constant 0 : i32
    %c0_i32_1 = arith.constant 0 : i32
    return %c0_i32, %c0_i32_0 : i32, i32
  }
  func.func @transform_3(%arg0: i32, %arg1: i32) -> (i32, i32) {
    %c0_i32 = arith.constant 0 : i32
    %c0_i32_0 = arith.constant 0 : i32
    %c0_i32_1 = arith.constant 0 : i32
    return %c0_i32, %c0_i32_0 : i32, i32
  }
  func.func @transform_4(%arg0: i32, %arg1: i32) -> (i32, i32, i32, i32) {
    %c0_i32 = arith.constant 0 : i32
    %c0_i32_0 = arith.constant 0 : i32
    %c0_i32_1 = arith.constant 0 : i32
    return %arg0, %arg1, %c0_i32, %c0_i32_0 : i32, i32, i32, i32
  }
}

</mosaic_0001>

<llo_original>
// kernel: downsample_forward.1
$region0: #{downsample_forward.1}
  #allocation0 [shape = 'u32[]', space=smem, size = 0x4, offset = 0x4, fixed_abs, tag = 'smem constant byte address 0x4 - core index']
  #allocation1 [shape = 'u32[72,128]{1,0:T(1,128)}', space=vmem, size = 0x9000, scoped, tag = 'internal scratch']
  %s0 = inlined_call_operand.vmem [shape: bf16[2,4,9,9,128], index: 0, kind: input, shape index: {}]
  %s1 = inlined_call_operand.vmem [shape: bf16[2,2,1,9,128], index: 1, kind: input, shape index: {}]
  %s2 = inlined_call_operand.vmem [shape: bf16[1152,128], index: 2, kind: input, shape index: {}]
  %s3 = inlined_call_operand.vmem [shape: f32[1,128], index: 3, kind: input, shape index: {}]
  %s4 = inlined_call_operand.vmem [shape: f32[2,8,8,128], index: 4, kind: output, shape index: {}]
  %s5 = sld [smem:[#allocation0]]
  $region111: #{downsample_forward.1} parent=0
    _
  %s7 = ssub.s32 1, %s5
  %s8 = scalar_select 0, %s7, %s5
  $region1: #{downsample_forward.1} parent=0
    #allocation2 [shape = 'u8[262144]{0}', space=vmem, size = 0x40000, scoped, tag = 'input window, operand 0']
    loop: start=0, step=1, limit=4
    $region2: #{downsample_forward.1} parent=1 // loop_pre_header
      _
    $region3: #{downsample_forward.1} parent=1 // loop_header
      %s10 = sphi 0, %s14
      %p11 = scmp.ge.s32.totalorder %s10, 4
      %s17 = sphi 0, %s29
      %s18 = sphi 0, %s25
      %s19 = sphi 0, %s17
      %s20 = sphi 0, %s18
      %s21 = sphi 0, %s19
      %s22 = sphi 0, %s20
      %s34 = sphi 0, %s36
      %s37 = sphi 0, %s34
      %s38 = sphi 0, %s37
      %s54 = sphi 0, %s38
      %s62 = sphi 0, %s64
      %s65 = sphi 0, %s62
      %s66 = sphi 0, %s65
      %s82 = sphi 0, %s66
      %s86 = sphi 0, %s86
      %s88 = sphi 0, %s86
      %s89 = sphi 0, %s88
      %s103 = sphi 0, %s89
      %s107 = sphi 0, %s107
      %s109 = sphi 0, %s107
      %s110 = sphi 0, %s109
      %s124 = sphi 0, %s110
      %s132 = sphi 0, %s134
      %s135 = sphi 0, %s132
      %s136 = sphi 0, %s135
      %s152 = sphi 0, %s136
    $region4: #{downsample_forward.1} parent=1 // loop_header_branch
      %13 = sbr.rel (%p11) target = $region8
    $region5: #{downsample_forward.1} parent=1 // loop_body
      %s15 = ssub.s32 %s10, 1
      %s16 = ssub.s32 %s10, 2
      %s23 = sadd.s32 1, %s18
      %p24 = scmp.ge.s32.totalorder %s23, 1
      %s25 = scalar_select %p24, 0, %s23
      %s26 = sadd.s32 1, %s17
      %s27 = scalar_select %p24, %s26, %s17
      %p28 = scmp.ge.s32.totalorder %s27, 2
      %s29 = scalar_select %p28, 0, %s27
      %s30 = ssub.s32 %s17, %s29
      %s31 = ssub.s32 %s18, %s25
      %s32 = sor.u32 %s30, %s31
      %p33 = scmp.eq.s32.totalorder %s32, 0
      %s35 = sadd.s32 %s34, 1
      %s36 = scalar_select %p33, %s34, %s35
      %p39 = pneg %p33
      %p40 = scmp.eq.s32.totalorder %s10, 1
      %p41 = por %p39, %p40
      %p42 = scmp.ne.s32.totalorder %s34, %s37
      %p43 = scmp.eq.s32.totalorder %s10, 0
      %p44 = por %p42, %p43
      %p45 = scmp.ne.s32.totalorder %s34, %s37
      %p46 = scmp.eq.s32.totalorder %s15, 1
      %p47 = por %p45, %p46
      %p48 = scmp.ne.s32.totalorder %s37, %s38
      %p49 = scmp.eq.s32.totalorder %s15, 0
      %p50 = por %p48, %p49
      %p51 = scmp.ne.s32.totalorder %s37, %s38
      %p52 = scmp.eq.s32.totalorder %s16, 1
      %p53 = por %p51, %p52
      %p55 = scmp.ne.s32.totalorder %s38, %s54
      %p56 = scmp.eq.s32.totalorder %s16, 0
      %p57 = por %p55, %p56
      %s58 = ssub.s32 %s17, %s29
      %s59 = ssub.s32 %s18, %s25
      %s60 = sor.u32 %s58, %s59
      %p61 = scmp.eq.s32.totalorder %s60, 0
      %s63 = sadd.s32 %s62, 1
      %s64 = scalar_select %p61, %s62, %s63
      %p67 = pneg %p61
      %p68 = scmp.eq.s32.totalorder %s10, 1
      %p69 = por %p67, %p68
      %p70 = scmp.ne.s32.totalorder %s62, %s65
      %p71 = scmp.eq.s32.totalorder %s10, 0
      %p72 = por %p70, %p71
      %p73 = scmp.ne.s32.totalorder %s62, %s65
      %p74 = scmp.eq.s32.totalorder %s15, 1
      %p75 = por %p73, %p74
      %p76 = scmp.ne.s32.totalorder %s65, %s66
      %p77 = scmp.eq.s32.totalorder %s15, 0
      %p78 = por %p76, %p77
      %p79 = scmp.ne.s32.totalorder %s65, %s66
      %p80 = scmp.eq.s32.totalorder %s16, 1
      %p81 = por %p79, %p80
      %p83 = scmp.ne.s32.totalorder %s66, %s82
      %p84 = scmp.eq.s32.totalorder %s16, 0
      %p85 = por %p83, %p84
      %s87 = sadd.s32 %s86, 1
      %p90 = scmp.eq.s32.totalorder %s10, 1
      %p91 = scmp.ne.s32.totalorder %s86, %s88
      %p92 = scmp.eq.s32.totalorder %s10, 0
      %p93 = por %p91, %p92
      %p94 = scmp.ne.s32.totalorder %s86, %s88
      %p95 = scmp.eq.s32.totalorder %s15, 1
      %p96 = por %p94, %p95
      %p97 = scmp.ne.s32.totalorder %s88, %s89
      %p98 = scmp.eq.s32.totalorder %s15, 0
      %p99 = por %p97, %p98
      %p100 = scmp.ne.s32.totalorder %s88, %s89
      %p101 = scmp.eq.s32.totalorder %s16, 1
      %p102 = por %p100, %p101
      %p104 = scmp.ne.s32.totalorder %s89, %s103
      %p105 = scmp.eq.s32.totalorder %s16, 0
      %p106 = por %p104, %p105
      %s108 = sadd.s32 %s107, 1
      %p111 = scmp.eq.s32.totalorder %s10, 1
      %p112 = scmp.ne.s32.totalorder %s107, %s109
      %p113 = scmp.eq.s32.totalorder %s10, 0
      %p114 = por %p112, %p113
      %p115 = scmp.ne.s32.totalorder %s107, %s109
      %p116 = scmp.eq.s32.totalorder %s15, 1
      %p117 = por %p115, %p116
      %p118 = scmp.ne.s32.totalorder %s109, %s110
      %p119 = scmp.eq.s32.totalorder %s15, 0
      %p120 = por %p118, %p119
      %p121 = scmp.ne.s32.totalorder %s109, %s110
      %p122 = scmp.eq.s32.totalorder %s16, 1
      %p123 = por %p121, %p122
      %p125 = scmp.ne.s32.totalorder %s110, %s124
      %p126 = scmp.eq.s32.totalorder %s16, 0
      %p127 = por %p125, %p126
      %s128 = ssub.s32 %s17, %s29
      %s129 = ssub.s32 %s18, %s25
      %s130 = sor.u32 %s128, %s129
      %p131 = scmp.eq.s32.totalorder %s130, 0
      %s133 = sadd.s32 %s132, 1
      %s134 = scalar_select %p131, %s132, %s133
      %p137 = pneg %p131
      %p138 = scmp.eq.s32.totalorder %s10, 1
      %p139 = por %p137, %p138
      %p140 = scmp.ne.s32.totalorder %s132, %s135
      %p141 = scmp.eq.s32.totalorder %s10, 0
      %p142 = por %p140, %p141
      %p143 = scmp.ne.s32.totalorder %s132, %s135
      %p144 = scmp.eq.s32.totalorder %s15, 1
      %p145 = por %p143, %p144
      %p146 = scmp.ne.s32.totalorder %s135, %s136
      %p147 = scmp.eq.s32.totalorder %s15, 0
      %p148 = por %p146, %p147
      %p149 = scmp.ne.s32.totalorder %s135, %s136
      %p150 = scmp.eq.s32.totalorder %s16, 1
      %p151 = por %p149, %p150
      %p153 = scmp.ne.s32.totalorder %s136, %s152
      %p154 = scmp.eq.s32.totalorder %s16, 0
      %p155 = por %p153, %p154
      %p156 = scmp.le.s32.totalorder 1, %s10
      %p157 = scmp.lt.s32.totalorder %s10, 3
      %p158 = pnand %p156, %p157
      %p159 = pneg %p158
      // Predicated region
      $region9: #{downsample_forward.1} parent=5 // pred_check
        _
      $region10: #{downsample_forward.1} parent=5 // pred_check_branch
        %161 = sbr.rel (%p158) target = $region12
      $region11: #{downsample_forward.1} parent=5 // pred_region
        %s162 = ssub.s32 %s10, 1
        // Predicated region
        $region13: #{downsample_forward.1} parent=11 // pred_check
          %p163 = pneg %p99
        $region14: #{downsample_forward.1} parent=11 // pred_check_branch
          %165 = sbr.rel (%p163) target = $region16
        $region15: #{downsample_forward.1} parent=11 // pred_region
          _
        $region16: #{downsample_forward.1} parent=11 // pred_fallthru
          _
        // Predicated region
        $region17: #{downsample_forward.1} parent=11 // pred_check
          %p166 = pneg %p120
        $region18: #{downsample_forward.1} parent=11 // pred_check_branch
          %168 = sbr.rel (%p166) target = $region20
        $region19: #{downsample_forward.1} parent=11 // pred_region
          _
        $region20: #{downsample_forward.1} parent=11 // pred_fallthru
          _
      $region12: #{downsample_forward.1} parent=5 // pred_fallthru
        _
      %p169 = scmp.lt.s32.totalorder %s10, 2
      // Predicated region
      $region21: #{downsample_forward.1} parent=5 // pred_check
        %p170 = pneg %p169
      $region22: #{downsample_forward.1} parent=5 // pred_check_branch
        %172 = sbr.rel (%p170) target = $region24
      $region23: #{downsample_forward.1} parent=5 // pred_region
        // Predicated region
        $region25: #{downsample_forward.1} parent=23 // pred_check
          %p173 = pneg %p44
        $region26: #{downsample_forward.1} parent=23 // pred_check_branch
          %175 = sbr.rel (%p173) target = $region28
        $region27: #{downsample_forward.1} parent=23 // pred_region
          %s176 = sand.u32 %s34, 1
          %s177 = sand.u32 %s34, 1
          %s178 = smul.addr %s177, 256
          %s179 = scalar_lea.vmem [#allocation2], %s178
          %s180 = smul.u32 8, %s18
          %s181 = ssub.s32 9, %s180
          %p182 = scmp.lt.s32.totalorder %s181, 8
          %s183 = scalar_select %p182, %s181, 8
          %s184 = smul.u32 16, %s183
          %s185 = smul.u32 %s184, 2
          %p186 = scmp.ne.s32.totalorder 0, %s185
          %s187 = smul.addr %s180, 2
          %s188 = smul.addr %s17, 72
          %s189 = sadd.s32 %s187, %s188
          %s190 = smul.addr %s189, 4
          %s191 = scalar_lea.vmem %s0, %s190
          %s192 = smul.u32 %s183, 2
          // Predicated region
          $region29: #{downsample_forward.1} parent=27 // pred_check
            %p193 = pneg %p186
          $region30: #{downsample_forward.1} parent=27 // pred_check_branch
            %195 = sbr.rel (%p193) target = $region32
          $region31: #{downsample_forward.1} parent=27 // pred_region
            // Predicated region
            $region33: #{downsample_forward.1} parent=31 // pred_check
              _
            $region34: #{downsample_forward.1} parent=31 // pred_check_branch
              %197 = sbr.rel target = $region36
            $region35: #{downsample_forward.1} parent=31 // pred_region
              // Predicated region
              $region55: #{downsample_forward.1} parent=35 // pred_check
                _
              $region56: #{downsample_forward.1} parent=35 // pred_check_branch
                %315 = sbr.rel (0) target = $region58
              $region57: #{downsample_forward.1} parent=35 // pred_region
                %s316 = sshrl.u32 %s192, 4
                // While loop
                $region59: #{downsample_forward.1} parent=57 // loop_pre_header
                  _
                $region60: #{downsample_forward.1} parent=57 // loop_header
                  %s318 = sphi 0, %s320
                  %p319 = scmp.ge.s32.totalorder %s318, %s316
                  %s323 = sphi 0, %s328
                  %s324 = sphi %s191, %s331
                  %s325 = sphi %s179, %s332
                $region61: #{downsample_forward.1} parent=57 // loop_header_branch
                  %322 = sbr.rel (%p319) target = $region65
                $region62: #{downsample_forward.1} parent=57 // loop_body
                  %s326 = sadd.s32 1, %s323
                  %p327 = scmp.ge.s32.totalorder %s326, %s316
                  %s328 = scalar_select %p327, 0, %s326
                  %s329 = smul.u32 %s328, 64
                  %s330 = smul.u32 %s328, 64
                  %s331 = scalar_lea.vmem %s191, %s329
                  %s332 = scalar_lea.vmem %s179, %s330 [#allocation2]
                $region63: #{downsample_forward.1} parent=57 // loop_footer
                  %s320 = sadd.s32 %s318, 1
                $region64: #{downsample_forward.1} parent=57 // loop_footer_branch
                  %317 = sbr.rel target = $region60
                $region65: #{downsample_forward.1} parent=57 // loop_exit
                  _
                %s333 = sshrl.u32 %s192, 4
                %s334 = sand.u32 %s192, 15
                %s335 = smul.u32 %s333, 16
                %s336 = smul.u32 4, %s335
                %s337 = scalar_lea.vmem %s191, %s336
                %s338 = smul.u32 4, %s335
                %s339 = scalar_lea.vmem %s179, %s338 [#allocation2]
                // While loop
                $region66: #{downsample_forward.1} parent=57 // loop_pre_header
                  _
                $region67: #{downsample_forward.1} parent=57 // loop_header
                  %s341 = sphi 0, %s343
                  %p342 = scmp.ge.s32.totalorder %s341, %s334
                  %s346 = sphi 0, %s351
                  %s347 = sphi %s337, %s354
                  %s348 = sphi %s339, %s355
                $region68: #{downsample_forward.1} parent=57 // loop_header_branch
                  %345 = sbr.rel (%p342) target = $region72
                $region69: #{downsample_forward.1} parent=57 // loop_body
                  %s349 = sadd.s32 1, %s346
                  %p350 = scmp.ge.s32.totalorder %s349, %s334
                  %s351 = scalar_select %p350, 0, %s349
                  %s352 = smul.u32 %s351, 4
                  %s353 = smul.u32 %s351, 4
                  %s354 = scalar_lea.vmem %s337, %s352
                  %s355 = scalar_lea.vmem %s339, %s353 [#allocation2]
                $region70: #{downsample_forward.1} parent=57 // loop_footer
                  %s343 = sadd.s32 %s341, 1
                $region71: #{downsample_forward.1} parent=57 // loop_footer_branch
                  %340 = sbr.rel target = $region67
                $region72: #{downsample_forward.1} parent=57 // loop_exit
                  _
                %s357 = ssub.s32 16, 1
                %s358 = sshrl.u32 %s192, 3
                // While loop
                $region73: #{downsample_forward.1} parent=57 // loop_pre_header
                  _
                $region74: #{downsample_forward.1} parent=57 // loop_header
                  %s360 = sphi 0, %s362
                  %p361 = scmp.ge.s32.totalorder %s360, %s358
                  %s365 = sphi 0, %s434
                  %s366 = sphi %s191, %s437
                  %s367 = sphi %s179, %s438
                $region75: #{downsample_forward.1} parent=57 // loop_header_branch
                  %364 = sbr.rel (%p361) target = $region79
                $region76: #{downsample_forward.1} parent=57 // loop_body
                  %v368 = vld [vmem:[%s366] sm:%s357]
                  %369 = vst [vmem:[%s367] sm:%s357] %v368
                  %v370 = vld [vmem:[%s366 + $0x4] sm:%s357]
                  %371 = vst [vmem:[%s367 + $0x4] sm:%s357] %v370
                  %v372 = vld [vmem:[%s366 + $0x8] sm:%s357]
                  %373 = vst [vmem:[%s367 + $0x8] sm:%s357] %v372
                  %v374 = vld [vmem:[%s366 + $0xc] sm:%s357]
                  %375 = vst [vmem:[%s367 + $0xc] sm:%s357] %v374
                  %v376 = vld [vmem:[%s366 + $0x10] sm:%s357]
                  %377 = vst [vmem:[%s367 + $0x10] sm:%s357] %v376
                  %v378 = vld [vmem:[%s366 + $0x14] sm:%s357]
                  %379 = vst [vmem:[%s367 + $0x14] sm:%s357] %v378
                  %v380 = vld [vmem:[%s366 + $0x18] sm:%s357]
                  %381 = vst [vmem:[%s367 + $0x18] sm:%s357] %v380
                  %v382 = vld [vmem:[%s366 + $0x1c] sm:%s357]
                  %383 = vst [vmem:[%s367 + $0x1c] sm:%s357] %v382
                  %v384 = vld [vmem:[%s366 + $0x48] sm:%s357]
                  %385 = vst [vmem:[%s367 + $0x40] sm:%s357] %v384
                  %v386 = vld [vmem:[%s366 + $0x4c] sm:%s357]
                  %387 = vst [vmem:[%s367 + $0x44] sm:%s357] %v386
                  %v388 = vld [vmem:[%s366 + $0x50] sm:%s357]
                  %389 = vst [vmem:[%s367 + $0x48] sm:%s357] %v388
                  %v390 = vld [vmem:[%s366 + $0x54] sm:%s357]
                  %391 = vst [vmem:[%s367 + $0x4c] sm:%s357] %v390
                  %v392 = vld [vmem:[%s366 + $0x58] sm:%s357]
                  %393 = vst [vmem:[%s367 + $0x50] sm:%s357] %v392
                  %v394 = vld [vmem:[%s366 + $0x5c] sm:%s357]
                  %395 = vst [vmem:[%s367 + $0x54] sm:%s357] %v394
                  %v396 = vld [vmem:[%s366 + $0x60] sm:%s357]
                  %397 = vst [vmem:[%s367 + $0x58] sm:%s357] %v396
                  %v398 = vld [vmem:[%s366 + $0x64] sm:%s357]
                  %399 = vst [vmem:[%s367 + $0x5c] sm:%s357] %v398
                  %v400 = vld [vmem:[%s366 + $0x90] sm:%s357]
                  %401 = vst [vmem:[%s367 + $0x80] sm:%s357] %v400
                  %v402 = vld [vmem:[%s366 + $0x94] sm:%s357]
                  %403 = vst [vmem:[%s367 + $0x84] sm:%s357] %v402
                  %v404 = vld [vmem:[%s366 + $0x98] sm:%s357]
                  %405 = vst [vmem:[%s367 + $0x88] sm:%s357] %v404
                  %v406 = vld [vmem:[%s366 + $0x9c] sm:%s357]
                  %407 = vst [vmem:[%s367 + $0x8c] sm:%s357] %v406
                  %v408 = vld [vmem:[%s366 + $0xa0] sm:%s357]
                  %409 = vst [vmem:[%s367 + $0x90] sm:%s357] %v408
                  %v410 = vld [vmem:[%s366 + $0xa4] sm:%s357]
                  %411 = vst [vmem:[%s367 + $0x94] sm:%s357] %v410
                  %v412 = vld [vmem:[%s366 + $0xa8] sm:%s357]
                  %413 = vst [vmem:[%s367 + $0x98] sm:%s357] %v412
                  %v414 = vld [vmem:[%s366 + $0xac] sm:%s357]
                  %415 = vst [vmem:[%s367 + $0x9c] sm:%s357] %v414
                  %v416 = vld [vmem:[%s366 + $0xd8] sm:%s357]
                  %417 = vst [vmem:[%s367 + $0xc0] sm:%s357] %v416
                  %v418 = vld [vmem:[%s366 + $0xdc] sm:%s357]
                  %419 = vst [vmem:[%s367 + $0xc4] sm:%s357] %v418
                  %v420 = vld [vmem:[%s366 + $0xe0] sm:%s357]
                  %421 = vst [vmem:[%s367 + $0xc8] sm:%s357] %v420
                  %v422 = vld [vmem:[%s366 + $0xe4] sm:%s357]
                  %423 = vst [vmem:[%s367 + $0xcc] sm:%s357] %v422
                  %v424 = vld [vmem:[%s366 + $0xe8] sm:%s357]
                  %425 = vst [vmem:[%s367 + $0xd0] sm:%s357] %v424
                  %v426 = vld [vmem:[%s366 + $0xec] sm:%s357]
                  %427 = vst [vmem:[%s367 + $0xd4] sm:%s357] %v426
                  %v428 = vld [vmem:[%s366 + $0xf0] sm:%s357]
                  %429 = vst [vmem:[%s367 + $0xd8] sm:%s357] %v428
                  %v430 = vld [vmem:[%s366 + $0xf4] sm:%s357]
                  %431 = vst [vmem:[%s367 + $0xdc] sm:%s357] %v430
                  %s432 = sadd.s32 1, %s365
                  %p433 = scmp.ge.s32.totalorder %s432, %s358
                  %s434 = scalar_select %p433, 0, %s432
                  %s435 = smul.u32 %s434, 32
                  %s436 = smul.u32 %s434, 32
                  %s437 = scalar_lea.vmem %s191, %s435
                  %s438 = scalar_lea.vmem %s179, %s436 [#allocation2]
                $region77: #{downsample_forward.1} parent=57 // loop_footer
                  %s362 = sadd.s32 %s360, 1
                $region78: #{downsample_forward.1} parent=57 // loop_footer_branch
                  %359 = sbr.rel target = $region74
                $region79: #{downsample_forward.1} parent=57 // loop_exit
                  _
                %s439 = sshrl.u32 %s192, 3
                %s440 = sand.u32 %s192, 7
                %s441 = smul.u32 %s439, 8
                %s442 = smul.u32 4, %s441
                %s443 = scalar_lea.vmem %s191, %s442
                %s444 = smul.u32 4, %s441
                %s445 = scalar_lea.vmem %s179, %s444 [#allocation2]
                // While loop
                $region80: #{downsample_forward.1} parent=57 // loop_pre_header
                  _
                $region81: #{downsample_forward.1} parent=57 // loop_header
                  %s447 = sphi 0, %s449
                  %p448 = scmp.ge.s32.totalorder %s447, %s440
                  %s452 = sphi 0, %s465
                  %s453 = sphi %s443, %s468
                  %s454 = sphi %s445, %s469
                $region82: #{downsample_forward.1} parent=57 // loop_header_branch
                  %451 = sbr.rel (%p448) target = $region86
                $region83: #{downsample_forward.1} parent=57 // loop_body
                  %v455 = vld [vmem:[%s453] sm:%s357]
                  %456 = vst [vmem:[%s454] sm:%s357] %v455
                  %v457 = vld [vmem:[%s453 + $0x48] sm:%s357]
                  %458 = vst [vmem:[%s454 + $0x40] sm:%s357] %v457
                  %v459 = vld [vmem:[%s453 + $0x90] sm:%s357]
                  %460 = vst [vmem:[%s454 + $0x80] sm:%s357] %v459
                  %v461 = vld [vmem:[%s453 + $0xd8] sm:%s357]
                  %462 = vst [vmem:[%s454 + $0xc0] sm:%s357] %v461
                  %s463 = sadd.s32 1, %s452
                  %p464 = scmp.ge.s32.totalorder %s463, %s440
                  %s465 = scalar_select %p464, 0, %s463
                  %s466 = smul.u32 %s465, 4
                  %s467 = smul.u32 %s465, 4
                  %s468 = scalar_lea.vmem %s443, %s466
                  %s469 = scalar_lea.vmem %s445, %s467 [#allocation2]
                $region84: #{downsample_forward.1} parent=57 // loop_footer
                  %s449 = sadd.s32 %s447, 1
                $region85: #{downsample_forward.1} parent=57 // loop_footer_branch
                  %446 = sbr.rel target = $region81
                $region86: #{downsample_forward.1} parent=57 // loop_exit
                  _
              $region58: #{downsample_forward.1} parent=35 // pred_fallthru
                _
            $region36: #{downsample_forward.1} parent=31 // pred_fallthru
              _
            // Predicated region
            $region37: #{downsample_forward.1} parent=31 // pred_check
              _
            $region38: #{downsample_forward.1} parent=31 // pred_check_branch
              %199 = sbr.rel (0) target = $region40
            $region39: #{downsample_forward.1} parent=31 // pred_region
              %s201 = ssub.s32 16, 1
              %s202 = sshrl.u32 %s192, 3
              // While loop
              $region41: #{downsample_forward.1} parent=39 // loop_pre_header
                _
              $region42: #{downsample_forward.1} parent=39 // loop_header
                %s204 = sphi 0, %s206
                %p205 = scmp.ge.s32.totalorder %s204, %s202
                %s209 = sphi 0, %s278
                %s210 = sphi %s191, %s281
                %s211 = sphi %s179, %s282
              $region43: #{downsample_forward.1} parent=39 // loop_header_branch
                %208 = sbr.rel (%p205) target = $region47
              $region44: #{downsample_forward.1} parent=39 // loop_body
                %v212 = vld [vmem:[%s210] sm:%s201]
                %213 = vst [vmem:[%s211] sm:%s201] %v212
                %v214 = vld [vmem:[%s210 + $0x4] sm:%s201]
                %215 = vst [vmem:[%s211 + $0x4] sm:%s201] %v214
                %v216 = vld [vmem:[%s210 + $0x8] sm:%s201]
                %217 = vst [vmem:[%s211 + $0x8] sm:%s201] %v216
                %v218 = vld [vmem:[%s210 + $0xc] sm:%s201]
                %219 = vst [vmem:[%s211 + $0xc] sm:%s201] %v218
                %v220 = vld [vmem:[%s210 + $0x10] sm:%s201]
                %221 = vst [vmem:[%s211 + $0x10] sm:%s201] %v220
                %v222 = vld [vmem:[%s210 + $0x14] sm:%s201]
                %223 = vst [vmem:[%s211 + $0x14] sm:%s201] %v222
                %v224 = vld [vmem:[%s210 + $0x18] sm:%s201]
                %225 = vst [vmem:[%s211 + $0x18] sm:%s201] %v224
                %v226 = vld [vmem:[%s210 + $0x1c] sm:%s201]
                %227 = vst [vmem:[%s211 + $0x1c] sm:%s201] %v226
                %v228 = vld [vmem:[%s210 + $0x48] sm:%s201]
                %229 = vst [vmem:[%s211 + $0x40] sm:%s201] %v228
                %v230 = vld [vmem:[%s210 + $0x4c] sm:%s201]
                %231 = vst [vmem:[%s211 + $0x44] sm:%s201] %v230
                %v232 = vld [vmem:[%s210 + $0x50] sm:%s201]
                %233 = vst [vmem:[%s211 + $0x48] sm:%s201] %v232
                %v234 = vld [vmem:[%s210 + $0x54] sm:%s201]
                %235 = vst [vmem:[%s211 + $0x4c] sm:%s201] %v234
                %v236 = vld [vmem:[%s210 + $0x58] sm:%s201]
                %237 = vst [vmem:[%s211 + $0x50] sm:%s201] %v236
                %v238 = vld [vmem:[%s210 + $0x5c] sm:%s201]
                %239 = vst [vmem:[%s211 + $0x54] sm:%s201] %v238
                %v240 = vld [vmem:[%s210 + $0x60] sm:%s201]
                %241 = vst [vmem:[%s211 + $0x58] sm:%s201] %v240
                %v242 = vld [vmem:[%s210 + $0x64] sm:%s201]
                %243 = vst [vmem:[%s211 + $0x5c] sm:%s201] %v242
                %v244 = vld [vmem:[%s210 + $0x90] sm:%s201]
                %245 = vst [vmem:[%s211 + $0x80] sm:%s201] %v244
                %v246 = vld [vmem:[%s210 + $0x94] sm:%s201]
                %247 = vst [vmem:[%s211 + $0x84] sm:%s201] %v246
                %v248 = vld [vmem:[%s210 + $0x98] sm:%s201]
                %249 = vst [vmem:[%s211 + $0x88] sm:%s201] %v248
                %v250 = vld [vmem:[%s210 + $0x9c] sm:%s201]
                %251 = vst [vmem:[%s211 + $0x8c] sm:%s201] %v250
                %v252 = vld [vmem:[%s210 + $0xa0] sm:%s201]
                %253 = vst [vmem:[%s211 + $0x90] sm:%s201] %v252
                %v254 = vld [vmem:[%s210 + $0xa4] sm:%s201]
                %255 = vst [vmem:[%s211 + $0x94] sm:%s201] %v254
                %v256 = vld [vmem:[%s210 + $0xa8] sm:%s201]
                %257 = vst [vmem:[%s211 + $0x98] sm:%s201] %v256
                %v258 = vld [vmem:[%s210 + $0xac] sm:%s201]
                %259 = vst [vmem:[%s211 + $0x9c] sm:%s201] %v258
                %v260 = vld [vmem:[%s210 + $0xd8] sm:%s201]
                %261 = vst [vmem:[%s211 + $0xc0] sm:%s201] %v260
                %v262 = vld [vmem:[%s210 + $0xdc] sm:%s201]
                %263 = vst [vmem:[%s211 + $0xc4] sm:%s201] %v262
                %v264 = vld [vmem:[%s210 + $0xe0] sm:%s201]
                %265 = vst [vmem:[%s211 + $0xc8] sm:%s201] %v264
                %v266 = vld [vmem:[%s210 + $0xe4] sm:%s201]
                %267 = vst [vmem:[%s211 + $0xcc] sm:%s201] %v266
                %v268 = vld [vmem:[%s210 + $0xe8] sm:%s201]
                %269 = vst [vmem:[%s211 + $0xd0] sm:%s201] %v268
                %v270 = vld [vmem:[%s210 + $0xec] sm:%s201]
                %271 = vst [vmem:[%s211 + $0xd4] sm:%s201] %v270
                %v272 = vld [vmem:[%s210 + $0xf0] sm:%s201]
                %273 = vst [vmem:[%s211 + $0xd8] sm:%s201] %v272
                %v274 = vld [vmem:[%s210 + $0xf4] sm:%s201]
                %275 = vst [vmem:[%s211 + $0xdc] sm:%s201] %v274
                %s276 = sadd.s32 1, %s209
                %p277 = scmp.ge.s32.totalorder %s276, %s202
                %s278 = scalar_select %p277, 0, %s276
                %s279 = smul.u32 %s278, 32
                %s280 = smul.u32 %s278, 32
                %s281 = scalar_lea.vmem %s191, %s279
                %s282 = scalar_lea.vmem %s179, %s280 [#allocation2]
              $region45: #{downsample_forward.1} parent=39 // loop_footer
                %s206 = sadd.s32 %s204, 1
              $region46: #{downsample_forward.1} parent=39 // loop_footer_branch
                %203 = sbr.rel target = $region42
              $region47: #{downsample_forward.1} parent=39 // loop_exit
                _
              %s283 = sshrl.u32 %s192, 3
              %s284 = sand.u32 %s192, 7
              %s285 = smul.u32 %s283, 8
              %s286 = smul.u32 4, %s285
              %s287 = scalar_lea.vmem %s191, %s286
              %s288 = smul.u32 4, %s285
              %s289 = scalar_lea.vmem %s179, %s288 [#allocation2]
              // While loop
              $region48: #{downsample_forward.1} parent=39 // loop_pre_header
                _
              $region49: #{downsample_forward.1} parent=39 // loop_header
                %s291 = sphi 0, %s293
                %p292 = scmp.ge.s32.totalorder %s291, %s284
                %s296 = sphi 0, %s309
                %s297 = sphi %s287, %s312
                %s298 = sphi %s289, %s313
              $region50: #{downsample_forward.1} parent=39 // loop_header_branch
                %295 = sbr.rel (%p292) target = $region54
              $region51: #{downsample_forward.1} parent=39 // loop_body
                %v299 = vld [vmem:[%s297] sm:%s201]
                %300 = vst [vmem:[%s298] sm:%s201] %v299
                %v301 = vld [vmem:[%s297 + $0x48] sm:%s201]
                %302 = vst [vmem:[%s298 + $0x40] sm:%s201] %v301
                %v303 = vld [vmem:[%s297 + $0x90] sm:%s201]
                %304 = vst [vmem:[%s298 + $0x80] sm:%s201] %v303
                %v305 = vld [vmem:[%s297 + $0xd8] sm:%s201]
                %306 = vst [vmem:[%s298 + $0xc0] sm:%s201] %v305
                %s307 = sadd.s32 1, %s296
                %p308 = scmp.ge.s32.totalorder %s307, %s284
                %s309 = scalar_select %p308, 0, %s307
                %s310 = smul.u32 %s309, 4
                %s311 = smul.u32 %s309, 4
                %s312 = scalar_lea.vmem %s287, %s310
                %s313 = scalar_lea.vmem %s289, %s311 [#allocation2]
              $region52: #{downsample_forward.1} parent=39 // loop_footer
                %s293 = sadd.s32 %s291, 1
              $region53: #{downsample_forward.1} parent=39 // loop_footer_branch
                %290 = sbr.rel target = $region49
              $region54: #{downsample_forward.1} parent=39 // loop_exit
                _
            $region40: #{downsample_forward.1} parent=31 // pred_fallthru
              _
          $region32: #{downsample_forward.1} parent=27 // pred_fallthru
            _
          %470 = vnop
        $region28: #{downsample_forward.1} parent=23 // pred_fallthru
          _
        // Predicated region
        $region87: #{downsample_forward.1} parent=23 // pred_check
          %p471 = pneg %p72
        $region88: #{downsample_forward.1} parent=23 // pred_check_branch
          %473 = sbr.rel (%p471) target = $region90
        $region89: #{downsample_forward.1} parent=23 // pred_region
          %p474 = scmp.lt.s32.totalorder %s17, 1
          %s475 = scalar_select %p474, %s17, 1
          %p476 = scmp.lt.s32.totalorder %s18, 0
          %s477 = scalar_select %p476, %s18, 0
          %s478 = smul.addr %s477, 2
          %s479 = smul.addr %s475, 4
          %s480 = sadd.s32 %s478, %s479
          %s481 = smul.addr %s480, 4
          %s482 = scalar_lea.vmem %s1, %s481
        $region90: #{downsample_forward.1} parent=23 // pred_fallthru
          _
      $region24: #{downsample_forward.1} parent=5 // pred_fallthru
        _
      %p483 = scmp.le.s32.totalorder 1, %s10
      %p484 = scmp.lt.s32.totalorder %s10, 3
      %p485 = pnand %p483, %p484
      %p486 = pneg %p485
      // Predicated region
      $region91: #{downsample_forward.1} parent=5 // pred_check
        _
      $region92: #{downsample_forward.1} parent=5 // pred_check_branch
        %488 = sbr.rel (%p485) target = $region94
      $region93: #{downsample_forward.1} parent=5 // pred_region
        %s489 = ssub.s32 %s10, 1
        %s490 = sand.u32 %s37, 1
        %s491 = sand.u32 %s37, 1
        %s492 = smul.addr %s491, 256
        %s493 = scalar_lea.vmem [#allocation2], %s492
        // Predicated region
        $region95: #{downsample_forward.1} parent=93 // pred_check
          %p494 = pneg %p50
        $region96: #{downsample_forward.1} parent=93 // pred_check_branch
          %496 = sbr.rel (%p494) target = $region98
        $region97: #{downsample_forward.1} parent=93 // pred_region
          _
        $region98: #{downsample_forward.1} parent=93 // pred_fallthru
          _
        %s497 = sand.u32 %s37, 1
        %s498 = sand.u32 %s37, 1
        %s499 = smul.addr %s498, 256
        %s500 = scalar_lea.vmem [#allocation2], %s499
        %p501 = pneg %p50
        %p502 = pneg %p47
        %p503 = scmp.lt.s32.totalorder %s19, 1
        %s504 = scalar_select %p503, %s19, 1
        %p505 = scmp.lt.s32.totalorder %s20, 0
        %s506 = scalar_select %p505, %s20, 0
        %s507 = smul.addr %s506, 2
        %s508 = smul.addr %s504, 4
        %s509 = sadd.s32 %s507, %s508
        %s510 = smul.addr %s509, 4
        %s511 = scalar_lea.vmem %s1, %s510
        %p512 = pneg %p78
        %p513 = pneg %p75
        %p514 = pneg %p99
        %p515 = pneg %p96
        %p516 = pneg %p120
        %p517 = pneg %p117
        %p518 = pneg %p148
        %p519 = pneg %p145
        %s520 = smul.u32 8, %s20
        %p521 = scmp.lt.s32.totalorder %s19, 1
        %s522 = scalar_select %p521, %s19, 1
        %p523 = scmp.lt.s32.totalorder %s520, 7
        %s524 = scalar_select %p523, %s520, 7
        %s525 = smul.addr %s522, 8
        %s526 = sadd.s32 %s524, %s525
        %s527 = smul.addr %s526, 8
        %s528 = scalar_lea.vmem %s4, %s527
        %s529 = smul.u32 8, %s20
        %s530 = ssub.s32 9, %s529
        %p531 = scmp.lt.s32.totalorder %s530, 8
        %s532 = scalar_select %p531, %s530, 8
        %s533 = smul.u32 16, %s532
        %s534 = smul.u32 %s533, 2
        %p535 = scmp.lt.s32.totalorder %s19, 1
        %s536 = scalar_select %p535, %s19, 1
        %p537 = scmp.lt.s32.totalorder %s20, 0
        %s538 = scalar_select %p537, %s20, 0
        %s539 = smul.addr %s538, 2
        %s540 = smul.addr %s536, 4
        %s541 = sadd.s32 %s539, %s540
        %s542 = smul.addr %s541, 4
        %s543 = scalar_lea.vmem %s1, %s542
        %s544 = smul.u32 8, %s20
        %p545 = scmp.lt.s32.totalorder %s19, 1
        %s546 = scalar_select %p545, %s19, 1
        %p547 = scmp.lt.s32.totalorder %s544, 7
        %s548 = scalar_select %p547, %s544, 7
        %s549 = smul.addr %s546, 8
        %s550 = sadd.s32 %s548, %s549
        %s551 = smul.addr %s550, 8
        %s552 = scalar_lea.vmem %s4, %s551
        %s553 = smul.u32 8, %s20
        %v554 = vld [vmem:[%s493] sm:$0xf]
        %v555 = vld [vmem:[%s493 + $0x8] sm:$0xf]
        %v556 = vld [vmem:[%s493 + $0x10] sm:$0xf]
        %v557 = vld [vmem:[%s493 + $0x18] sm:$0xf]
        %v558 = vld [vmem:[%s493 + $0x20] sm:$0xf]
        %v559 = vld [vmem:[%s493 + $0x28] sm:$0xf]
        %v560 = vld [vmem:[%s493 + $0x30] sm:$0xf]
        %v561 = vld [vmem:[%s493 + $0x38] sm:$0xf]
        %s562 = scalar_lea.vmem %s493, 64 [#allocation2]
        %v563 = vld [vmem:[%s562] sm:$0xf]
        %v564 = vld [vmem:[%s562 + $0x8] sm:$0xf]
        %v565 = vld [vmem:[%s562 + $0x10] sm:$0xf]
        %v566 = vld [vmem:[%s562 + $0x18] sm:$0xf]
        %v567 = vld [vmem:[%s562 + $0x20] sm:$0xf]
        %v568 = vld [vmem:[%s562 + $0x28] sm:$0xf]
        %v569 = vld [vmem:[%s562 + $0x30] sm:$0xf]
        %v570 = vld [vmem:[%s562 + $0x38] sm:$0xf]
        %v571 = vld [vmem:[%s493 + $0x4] sm:$0x1]
        %v572 = vld [vmem:[%s493 + $0xc] sm:$0x1]
        %v573 = vld [vmem:[%s493 + $0x14] sm:$0x1]
        %v574 = vld [vmem:[%s493 + $0x1c] sm:$0x1]
        %v575 = vld [vmem:[%s493 + $0x24] sm:$0x1]
        %v576 = vld [vmem:[%s493 + $0x2c] sm:$0x1]
        %v577 = vld [vmem:[%s493 + $0x34] sm:$0x1]
        %v578 = vld [vmem:[%s493 + $0x3c] sm:$0x1]
        %vm579 = vsmask.f32 3328
        %vm580 = vsmask.f32 7440
        %vm581 = vmor %vm579, %vm580
        %v583 = vshrl.u32 %v554, 16
        %v585 = vrot.slane %v583, 4
        %v586 = vshll.u32 %v554, 16
        %v588 = vrot.slane %v586, 5
        %v589 = vor.u32 %v585, %v588
        %v590 = vrot.slane %v589, 4
        %v592 = vshll.u32 %v571, 16
        %v594 = vrot.slane %v592, 5
        %v595 = vsel %vm581, %v590, %v594
        %v597 = vshrl.u32 %v555, 16
        %v599 = vrot.slane %v597, 4
        %v600 = vshll.u32 %v555, 16
        %v602 = vrot.slane %v600, 5
        %v603 = vor.u32 %v599, %v602
        %v604 = vrot.slane %v603, 4
        %v606 = vshll.u32 %v572, 16
        %v608 = vrot.slane %v606, 5
        %v609 = vsel %vm581, %v604, %v608
        %v611 = vshrl.u32 %v556, 16
        %v613 = vrot.slane %v611, 4
        %v614 = vshll.u32 %v556, 16
        %v616 = vrot.slane %v614, 5
        %v617 = vor.u32 %v613, %v616
        %v618 = vrot.slane %v617, 4
        %v620 = vshll.u32 %v573, 16
        %v622 = vrot.slane %v620, 5
        %v623 = vsel %vm581, %v618, %v622
        %v625 = vshrl.u32 %v557, 16
        %v627 = vrot.slane %v625, 4
        %v628 = vshll.u32 %v557, 16
        %v630 = vrot.slane %v628, 5
        %v631 = vor.u32 %v627, %v630
        %v632 = vrot.slane %v631, 4
        %v634 = vshll.u32 %v574, 16
        %v636 = vrot.slane %v634, 5
        %v637 = vsel %vm581, %v632, %v636
        %v639 = vshrl.u32 %v558, 16
        %v641 = vrot.slane %v639, 4
        %v642 = vshll.u32 %v558, 16
        %v644 = vrot.slane %v642, 5
        %v645 = vor.u32 %v641, %v644
        %v646 = vrot.slane %v645, 4
        %v648 = vshll.u32 %v575, 16
        %v650 = vrot.slane %v648, 5
        %v651 = vsel %vm581, %v646, %v650
        %v653 = vshrl.u32 %v559, 16
        %v655 = vrot.slane %v653, 4
        %v656 = vshll.u32 %v559, 16
        %v658 = vrot.slane %v656, 5
        %v659 = vor.u32 %v655, %v658
        %v660 = vrot.slane %v659, 4
        %v662 = vshll.u32 %v576, 16
        %v664 = vrot.slane %v662, 5
        %v665 = vsel %vm581, %v660, %v664
        %v667 = vshrl.u32 %v560, 16
        %v669 = vrot.slane %v667, 4
        %v670 = vshll.u32 %v560, 16
        %v672 = vrot.slane %v670, 5
        %v673 = vor.u32 %v669, %v672
        %v674 = vrot.slane %v673, 4
        %v676 = vshll.u32 %v577, 16
        %v678 = vrot.slane %v676, 5
        %v679 = vsel %vm581, %v674, %v678
        %v681 = vshrl.u32 %v561, 16
        %v683 = vrot.slane %v681, 4
        %v684 = vshll.u32 %v561, 16
        %v686 = vrot.slane %v684, 5
        %v687 = vor.u32 %v683, %v686
        %v688 = vrot.slane %v687, 4
        %v690 = vshll.u32 %v578, 16
        %v692 = vrot.slane %v690, 5
        %v693 = vsel %vm581, %v688, %v692
        %s694 = scalar_lea.vmem %s493, 128 [#allocation2]
        %v695 = vld [vmem:[%s694] sm:$0xf]
        %v696 = vld [vmem:[%s694 + $0x8] sm:$0xf]
        %v697 = vld [vmem:[%s694 + $0x10] sm:$0xf]
        %v698 = vld [vmem:[%s694 + $0x18] sm:$0xf]
        %v699 = vld [vmem:[%s694 + $0x20] sm:$0xf]
        %v700 = vld [vmem:[%s694 + $0x28] sm:$0xf]
        %v701 = vld [vmem:[%s694 + $0x30] sm:$0xf]
        %v702 = vld [vmem:[%s694 + $0x38] sm:$0xf]
        %s703 = scalar_lea.vmem %s493, 192 [#allocation2]
        %v704 = vld [vmem:[%s703] sm:$0xf]
        %v705 = vld [vmem:[%s703 + $0x8] sm:$0xf]
        %v706 = vld [vmem:[%s703 + $0x10] sm:$0xf]
        %v707 = vld [vmem:[%s703 + $0x18] sm:$0xf]
        %v708 = vld [vmem:[%s703 + $0x20] sm:$0xf]
        %v709 = vld [vmem:[%s703 + $0x28] sm:$0xf]
        %v710 = vld [vmem:[%s703 + $0x30] sm:$0xf]
        %v711 = vld [vmem:[%s703 + $0x38] sm:$0xf]
        %v712 = vld [vmem:[%s694 + $0x4] sm:$0x1]
        %v713 = vld [vmem:[%s694 + $0xc] sm:$0x1]
        %v714 = vld [vmem:[%s694 + $0x14] sm:$0x1]
        %v715 = vld [vmem:[%s694 + $0x1c] sm:$0x1]
        %v716 = vld [vmem:[%s694 + $0x24] sm:$0x1]
        %v717 = vld [vmem:[%s694 + $0x2c] sm:$0x1]
        %v718 = vld [vmem:[%s694 + $0x34] sm:$0x1]
        %v719 = vld [vmem:[%s694 + $0x3c] sm:$0x1]
        %v721 = vshrl.u32 %v695, 16
        %v723 = vrot.slane %v721, 4
        %v724 = vshll.u32 %v695, 16
        %v726 = vrot.slane %v724, 5
        %v727 = vor.u32 %v723, %v726
        %v728 = vrot.slane %v727, 4
        %v730 = vshll.u32 %v712, 16
        %v732 = vrot.slane %v730, 5
        %v733 = vsel %vm581, %v728, %v732
        %v735 = vshrl.u32 %v696, 16
        %v737 = vrot.slane %v735, 4
        %v738 = vshll.u32 %v696, 16
        %v740 = vrot.slane %v738, 5
        %v741 = vor.u32 %v737, %v740
        %v742 = vrot.slane %v741, 4
        %v744 = vshll.u32 %v713, 16
        %v746 = vrot.slane %v744, 5
        %v747 = vsel %vm581, %v742, %v746
        %v749 = vshrl.u32 %v697, 16
        %v751 = vrot.slane %v749, 4
        %v752 = vshll.u32 %v697, 16
        %v754 = vrot.slane %v752, 5
        %v755 = vor.u32 %v751, %v754
        %v756 = vrot.slane %v755, 4
        %v758 = vshll.u32 %v714, 16
        %v760 = vrot.slane %v758, 5
        %v761 = vsel %vm581, %v756, %v760
        %v763 = vshrl.u32 %v698, 16
        %v765 = vrot.slane %v763, 4
        %v766 = vshll.u32 %v698, 16
        %v768 = vrot.slane %v766, 5
        %v769 = vor.u32 %v765, %v768
        %v770 = vrot.slane %v769, 4
        %v772 = vshll.u32 %v715, 16
        %v774 = vrot.slane %v772, 5
        %v775 = vsel %vm581, %v770, %v774
        %v777 = vshrl.u32 %v699, 16
        %v779 = vrot.slane %v777, 4
        %v780 = vshll.u32 %v699, 16
        %v782 = vrot.slane %v780, 5
        %v783 = vor.u32 %v779, %v782
        %v784 = vrot.slane %v783, 4
        %v786 = vshll.u32 %v716, 16
        %v788 = vrot.slane %v786, 5
        %v789 = vsel %vm581, %v784, %v788
        %v791 = vshrl.u32 %v700, 16
        %v793 = vrot.slane %v791, 4
        %v794 = vshll.u32 %v700, 16
        %v796 = vrot.slane %v794, 5
        %v797 = vor.u32 %v793, %v796
        %v798 = vrot.slane %v797, 4
        %v800 = vshll.u32 %v717, 16
        %v802 = vrot.slane %v800, 5
        %v803 = vsel %vm581, %v798, %v802
        %v805 = vshrl.u32 %v701, 16
        %v807 = vrot.slane %v805, 4
        %v808 = vshll.u32 %v701, 16
        %v810 = vrot.slane %v808, 5
        %v811 = vor.u32 %v807, %v810
        %v812 = vrot.slane %v811, 4
        %v814 = vshll.u32 %v718, 16
        %v816 = vrot.slane %v814, 5
        %v817 = vsel %vm581, %v812, %v816
        %v819 = vshrl.u32 %v702, 16
        %v821 = vrot.slane %v819, 4
        %v822 = vshll.u32 %v702, 16
        %v824 = vrot.slane %v822, 5
        %v825 = vor.u32 %v821, %v824
        %v826 = vrot.slane %v825, 4
        %v828 = vshll.u32 %v719, 16
        %v830 = vrot.slane %v828, 5
        %v831 = vsel %vm581, %v826, %v830
        %v832 = vld [vmem:[%s543] sm:$0xf]
        %s833 = scalar_lea.vmem %s493, 8 [#allocation2]
        %v834 = vld [vmem:[%s833] sm:$0xf]
        %v835 = vld [vmem:[%s833 + $0x8] sm:$0xf]
        %v836 = vld [vmem:[%s833 + $0x10] sm:$0xf]
        %v837 = vld [vmem:[%s833 + $0x18] sm:$0xf]
        %v838 = vld [vmem:[%s833 + $0x20] sm:$0xf]
        %v839 = vld [vmem:[%s833 + $0x28] sm:$0xf]
        %v840 = vld [vmem:[%s833 + $0x30] sm:$0xf]
        %s841 = scalar_lea.vmem %s543, 8
        %v842 = vld [vmem:[%s841] sm:$0xf]
        %s843 = scalar_lea.vmem %s493, 72 [#allocation2]
        %v844 = vld [vmem:[%s843] sm:$0xf]
        %v845 = vld [vmem:[%s843 + $0x8] sm:$0xf]
        %v846 = vld [vmem:[%s843 + $0x10] sm:$0xf]
        %v847 = vld [vmem:[%s843 + $0x18] sm:$0xf]
        %v848 = vld [vmem:[%s843 + $0x20] sm:$0xf]
        %v849 = vld [vmem:[%s843 + $0x28] sm:$0xf]
        %v850 = vld [vmem:[%s843 + $0x30] sm:$0xf]
        %v851 = vld [vmem:[%s543 + $0x4] sm:$0x1]
        %v852 = vld [vmem:[%s833 + $0x4] sm:$0x1]
        %v853 = vld [vmem:[%s833 + $0xc] sm:$0x1]
        %v854 = vld [vmem:[%s833 + $0x14] sm:$0x1]
        %v855 = vld [vmem:[%s833 + $0x1c] sm:$0x1]
        %v856 = vld [vmem:[%s833 + $0x24] sm:$0x1]
        %v857 = vld [vmem:[%s833 + $0x2c] sm:$0x1]
        %v858 = vld [vmem:[%s833 + $0x34] sm:$0x1]
        %v860 = vshrl.u32 %v834, 16
        %v862 = vrot.slane %v860, 4
        %v863 = vshll.u32 %v834, 16
        %v865 = vrot.slane %v863, 5
        %v866 = vor.u32 %v862, %v865
        %v867 = vrot.slane %v866, 4
        %v869 = vshll.u32 %v852, 16
        %v871 = vrot.slane %v869, 5
        %v872 = vsel %vm581, %v867, %v871
        %v874 = vshrl.u32 %v835, 16
        %v876 = vrot.slane %v874, 4
        %v877 = vshll.u32 %v835, 16
        %v879 = vrot.slane %v877, 5
        %v880 = vor.u32 %v876, %v879
        %v881 = vrot.slane %v880, 4
        %v883 = vshll.u32 %v853, 16
        %v885 = vrot.slane %v883, 5
        %v886 = vsel %vm581, %v881, %v885
        %v888 = vshrl.u32 %v836, 16
        %v890 = vrot.slane %v888, 4
        %v891 = vshll.u32 %v836, 16
        %v893 = vrot.slane %v891, 5
        %v894 = vor.u32 %v890, %v893
        %v895 = vrot.slane %v894, 4
        %v897 = vshll.u32 %v854, 16
        %v899 = vrot.slane %v897, 5
        %v900 = vsel %vm581, %v895, %v899
        %v902 = vshrl.u32 %v837, 16
        %v904 = vrot.slane %v902, 4
        %v905 = vshll.u32 %v837, 16
        %v907 = vrot.slane %v905, 5
        %v908 = vor.u32 %v904, %v907
        %v909 = vrot.slane %v908, 4
        %v911 = vshll.u32 %v855, 16
        %v913 = vrot.slane %v911, 5
        %v914 = vsel %vm581, %v909, %v913
        %v916 = vshrl.u32 %v838, 16
        %v918 = vrot.slane %v916, 4
        %v919 = vshll.u32 %v838, 16
        %v921 = vrot.slane %v919, 5
        %v922 = vor.u32 %v918, %v921
        %v923 = vrot.slane %v922, 4
        %v925 = vshll.u32 %v856, 16
        %v927 = vrot.slane %v925, 5
        %v928 = vsel %vm581, %v923, %v927
        %v930 = vshrl.u32 %v839, 16
        %v932 = vrot.slane %v930, 4
        %v933 = vshll.u32 %v839, 16
        %v935 = vrot.slane %v933, 5
        %v936 = vor.u32 %v932, %v935
        %v937 = vrot.slane %v936, 4
        %v939 = vshll.u32 %v857, 16
        %v941 = vrot.slane %v939, 5
        %v942 = vsel %vm581, %v937, %v941
        %v944 = vshrl.u32 %v840, 16
        %v946 = vrot.slane %v944, 4
        %v947 = vshll.u32 %v840, 16
        %v949 = vrot.slane %v947, 5
        %v950 = vor.u32 %v946, %v949
        %v951 = vrot.slane %v950, 4
        %v953 = vshll.u32 %v858, 16
        %v955 = vrot.slane %v953, 5
        %v956 = vsel %vm581, %v951, %v955
        %v958 = vshrl.u32 %v832, 16
        %v960 = vrot.slane %v958, 4
        %v961 = vshll.u32 %v832, 16
        %v963 = vrot.slane %v961, 5
        %v964 = vor.u32 %v960, %v963
        %v965 = vrot.slane %v964, 4
        %v967 = vshll.u32 %v851, 16
        %v969 = vrot.slane %v967, 5
        %v970 = vsel %vm581, %v965, %v969
        %v979 = vunpack.c.l.b16 %v554
        %v980 = vunpack.c.l.b16 %v555
        %v981 = vunpack.c.l.b16 %v556
        %v982 = vunpack.c.l.b16 %v557
        %v983 = vunpack.c.l.b16 %v558
        %v984 = vunpack.c.l.b16 %v559
        %v985 = vunpack.c.l.b16 %v560
        %v986 = vunpack.c.l.b16 %v561
        %v987 = vpack.c.b16 %v980, %v979
        %v988 = vpack.c.b16 %v982, %v981
        %v989 = vpack.c.b16 %v984, %v983
        %v990 = vpack.c.b16 %v986, %v985
        %v1003 = vunpack.c.l.b16 %v563
        %v1004 = vunpack.c.l.b16 %v564
        %v1005 = vunpack.c.l.b16 %v565
        %v1006 = vunpack.c.l.b16 %v566
        %v1007 = vunpack.c.l.b16 %v567
        %v1008 = vunpack.c.l.b16 %v568
        %v1009 = vunpack.c.l.b16 %v569
        %v1010 = vunpack.c.l.b16 %v570
        %v1011 = vpack.c.b16 %v1004, %v1003
        %v1012 = vpack.c.b16 %v1006, %v1005
        %v1013 = vpack.c.b16 %v1008, %v1007
        %v1014 = vpack.c.b16 %v1010, %v1009
        %v1019 = vunpack.c.l.b16 %v595
        %v1020 = vunpack.c.l.b16 %v609
        %v1021 = vunpack.c.l.b16 %v623
        %v1022 = vunpack.c.l.b16 %v637
        %v1023 = vunpack.c.l.b16 %v651
        %v1024 = vunpack.c.l.b16 %v665
        %v1025 = vunpack.c.l.b16 %v679
        %v1026 = vunpack.c.l.b16 %v693
        %v1027 = vpack.c.b16 %v1020, %v1019
        %v1028 = vpack.c.b16 %v1022, %v1021
        %v1029 = vpack.c.b16 %v1024, %v1023
        %v1030 = vpack.c.b16 %v1026, %v1025
        %v1043 = vunpack.c.l.b16 %v695
        %v1044 = vunpack.c.l.b16 %v696
        %v1045 = vunpack.c.l.b16 %v697
        %v1046 = vunpack.c.l.b16 %v698
        %v1047 = vunpack.c.l.b16 %v699
        %v1048 = vunpack.c.l.b16 %v700
        %v1049 = vunpack.c.l.b16 %v701
        %v1050 = vunpack.c.l.b16 %v702
        %v1051 = vpack.c.b16 %v1044, %v1043
        %v1052 = vpack.c.b16 %v1046, %v1045
        %v1053 = vpack.c.b16 %v1048, %v1047
        %v1054 = vpack.c.b16 %v1050, %v1049
        %v1067 = vunpack.c.l.b16 %v704
        %v1068 = vunpack.c.l.b16 %v705
        %v1069 = vunpack.c.l.b16 %v706
        %v1070 = vunpack.c.l.b16 %v707
        %v1071 = vunpack.c.l.b16 %v708
        %v1072 = vunpack.c.l.b16 %v709
        %v1073 = vunpack.c.l.b16 %v710
        %v1074 = vunpack.c.l.b16 %v711
        %v1075 = vpack.c.b16 %v1068, %v1067
        %v1076 = vpack.c.b16 %v1070, %v1069
        %v1077 = vpack.c.b16 %v1072, %v1071
        %v1078 = vpack.c.b16 %v1074, %v1073
        %v1083 = vunpack.c.l.b16 %v733
        %v1084 = vunpack.c.l.b16 %v747
        %v1085 = vunpack.c.l.b16 %v761
        %v1086 = vunpack.c.l.b16 %v775
        %v1087 = vunpack.c.l.b16 %v789
        %v1088 = vunpack.c.l.b16 %v803
        %v1089 = vunpack.c.l.b16 %v817
        %v1090 = vunpack.c.l.b16 %v831
        %v1091 = vpack.c.b16 %v1084, %v1083
        %v1092 = vpack.c.b16 %v1086, %v1085
        %v1093 = vpack.c.b16 %v1088, %v1087
        %v1094 = vpack.c.b16 %v1090, %v1089
        %v1107 = vunpack.c.l.b16 %v834
        %v1108 = vunpack.c.l.b16 %v835
        %v1109 = vunpack.c.l.b16 %v836
        %v1110 = vunpack.c.l.b16 %v837
        %v1111 = vunpack.c.l.b16 %v838
        %v1112 = vunpack.c.l.b16 %v839
        %v1113 = vunpack.c.l.b16 %v840
        %v1114 = vunpack.c.l.b16 %v832
        %v1115 = vpack.c.b16 %v1108, %v1107
        %v1116 = vpack.c.b16 %v1110, %v1109
        %v1117 = vpack.c.b16 %v1112, %v1111
        %v1118 = vpack.c.b16 %v1114, %v1113
        %v1131 = vunpack.c.l.b16 %v844
        %v1132 = vunpack.c.l.b16 %v845
        %v1133 = vunpack.c.l.b16 %v846
        %v1134 = vunpack.c.l.b16 %v847
        %v1135 = vunpack.c.l.b16 %v848
        %v1136 = vunpack.c.l.b16 %v849
        %v1137 = vunpack.c.l.b16 %v850
        %v1138 = vunpack.c.l.b16 %v842
        %v1139 = vpack.c.b16 %v1132, %v1131
        %v1140 = vpack.c.b16 %v1134, %v1133
        %v1141 = vpack.c.b16 %v1136, %v1135
        %v1142 = vpack.c.b16 %v1138, %v1137
        %v1147 = vunpack.c.l.b16 %v872
        %v1148 = vunpack.c.l.b16 %v886
        %v1149 = vunpack.c.l.b16 %v900
        %v1150 = vunpack.c.l.b16 %v914
        %v1151 = vunpack.c.l.b16 %v928
        %v1152 = vunpack.c.l.b16 %v942
        %v1153 = vunpack.c.l.b16 %v956
        %v1154 = vunpack.c.l.b16 %v970
        %v1155 = vpack.c.b16 %v1148, %v1147
        %v1156 = vpack.c.b16 %v1150, %v1149
        %v1157 = vpack.c.b16 %v1152, %v1151
        %v1158 = vpack.c.b16 %v1154, %v1153
        %v1163 = vld [vmem:[%s2] sm:$0xf]
        %v1164 = vld [vmem:[%s2 + $0x4] sm:$0xf]
        %v1165 = vld [vmem:[%s2 + $0x8] sm:$0xf]
        %v1166 = vld [vmem:[%s2 + $0xc] sm:$0xf]
        %v1167 = vld [vmem:[%s2 + $0x10] sm:$0xf]
        %v1168 = vld [vmem:[%s2 + $0x14] sm:$0xf]
        %v1169 = vld [vmem:[%s2 + $0x18] sm:$0xf]
        %v1170 = vld [vmem:[%s2 + $0x1c] sm:$0xf]
        %v1171 = vld [vmem:[%s2 + $0x20] sm:$0xf]
        %v1172 = vld [vmem:[%s2 + $0x24] sm:$0xf]
        %v1173 = vld [vmem:[%s2 + $0x28] sm:$0xf]
        %v1174 = vld [vmem:[%s2 + $0x2c] sm:$0xf]
        %v1175 = vld [vmem:[%s2 + $0x30] sm:$0xf]
        %v1176 = vld [vmem:[%s2 + $0x34] sm:$0xf]
        %v1177 = vld [vmem:[%s2 + $0x38] sm:$0xf]
        %v1178 = vld [vmem:[%s2 + $0x3c] sm:$0xf]
        %v1179 = vld [vmem:[%s2 + $0x40] sm:$0xf]
        %v1180 = vld [vmem:[%s2 + $0x44] sm:$0xf]
        %v1181 = vld [vmem:[%s2 + $0x48] sm:$0xf]
        %v1182 = vld [vmem:[%s2 + $0x4c] sm:$0xf]
        %v1183 = vld [vmem:[%s2 + $0x50] sm:$0xf]
        %v1184 = vld [vmem:[%s2 + $0x54] sm:$0xf]
        %v1185 = vld [vmem:[%s2 + $0x58] sm:$0xf]
        %v1186 = vld [vmem:[%s2 + $0x5c] sm:$0xf]
        %v1187 = vld [vmem:[%s2 + $0x60] sm:$0xf]
        %v1188 = vld [vmem:[%s2 + $0x64] sm:$0xf]
        %v1189 = vld [vmem:[%s2 + $0x68] sm:$0xf]
        %v1190 = vld [vmem:[%s2 + $0x6c] sm:$0xf]
        %v1191 = vld [vmem:[%s2 + $0x70] sm:$0xf]
        %v1192 = vld [vmem:[%s2 + $0x74] sm:$0xf]
        %v1193 = vld [vmem:[%s2 + $0x78] sm:$0xf]
        %v1194 = vld [vmem:[%s2 + $0x7c] sm:$0xf]
        %v1195 = vld [vmem:[%s2 + $0x80] sm:$0xf]
        %v1196 = vld [vmem:[%s2 + $0x84] sm:$0xf]
        %v1197 = vld [vmem:[%s2 + $0x88] sm:$0xf]
        %v1198 = vld [vmem:[%s2 + $0x8c] sm:$0xf]
        %v1199 = vld [vmem:[%s2 + $0x90] sm:$0xf]
        %v1200 = vld [vmem:[%s2 + $0x94] sm:$0xf]
        %v1201 = vld [vmem:[%s2 + $0x98] sm:$0xf]
        %v1202 = vld [vmem:[%s2 + $0x9c] sm:$0xf]
        %v1203 = vld [vmem:[%s2 + $0xa0] sm:$0xf]
        %v1204 = vld [vmem:[%s2 + $0xa4] sm:$0xf]
        %v1205 = vld [vmem:[%s2 + $0xa8] sm:$0xf]
        %v1206 = vld [vmem:[%s2 + $0xac] sm:$0xf]
        %v1207 = vld [vmem:[%s2 + $0xb0] sm:$0xf]
        %v1208 = vld [vmem:[%s2 + $0xb4] sm:$0xf]
        %v1209 = vld [vmem:[%s2 + $0xb8] sm:$0xf]
        %v1210 = vld [vmem:[%s2 + $0xbc] sm:$0xf]
        %v1211 = vld [vmem:[%s2 + $0xc0] sm:$0xf]
        %v1212 = vld [vmem:[%s2 + $0xc4] sm:$0xf]
        %v1213 = vld [vmem:[%s2 + $0xc8] sm:$0xf]
        %v1214 = vld [vmem:[%s2 + $0xcc] sm:$0xf]
        %v1215 = vld [vmem:[%s2 + $0xd0] sm:$0xf]
        %v1216 = vld [vmem:[%s2 + $0xd4] sm:$0xf]
        %v1217 = vld [vmem:[%s2 + $0xd8] sm:$0xf]
        %v1218 = vld [vmem:[%s2 + $0xdc] sm:$0xf]
        %v1219 = vld [vmem:[%s2 + $0xe0] sm:$0xf]
        %v1220 = vld [vmem:[%s2 + $0xe4] sm:$0xf]
        %v1221 = vld [vmem:[%s2 + $0xe8] sm:$0xf]
        %v1222 = vld [vmem:[%s2 + $0xec] sm:$0xf]
        %v1223 = vld [vmem:[%s2 + $0xf0] sm:$0xf]
        %v1224 = vld [vmem:[%s2 + $0xf4] sm:$0xf]
        %v1225 = vld [vmem:[%s2 + $0xf8] sm:$0xf]
        %v1226 = vld [vmem:[%s2 + $0xfc] sm:$0xf]
        %v1227 = vld [vmem:[%s2 + $0x100] sm:$0xf]
        %v1228 = vld [vmem:[%s2 + $0x104] sm:$0xf]
        %v1229 = vld [vmem:[%s2 + $0x108] sm:$0xf]
        %v1230 = vld [vmem:[%s2 + $0x10c] sm:$0xf]
        %v1231 = vld [vmem:[%s2 + $0x110] sm:$0xf]
        %v1232 = vld [vmem:[%s2 + $0x114] sm:$0xf]
        %v1233 = vld [vmem:[%s2 + $0x118] sm:$0xf]
        %v1234 = vld [vmem:[%s2 + $0x11c] sm:$0xf]
        %v1235 = vld [vmem:[%s2 + $0x120] sm:$0xf]
        %v1236 = vld [vmem:[%s2 + $0x124] sm:$0xf]
        %v1237 = vld [vmem:[%s2 + $0x128] sm:$0xf]
        %v1238 = vld [vmem:[%s2 + $0x12c] sm:$0xf]
        %v1239 = vld [vmem:[%s2 + $0x130] sm:$0xf]
        %v1240 = vld [vmem:[%s2 + $0x134] sm:$0xf]
        %v1241 = vld [vmem:[%s2 + $0x138] sm:$0xf]
        %v1242 = vld [vmem:[%s2 + $0x13c] sm:$0xf]
        %v1243 = vld [vmem:[%s2 + $0x140] sm:$0xf]
        %v1244 = vld [vmem:[%s2 + $0x144] sm:$0xf]
        %v1245 = vld [vmem:[%s2 + $0x148] sm:$0xf]
        %v1246 = vld [vmem:[%s2 + $0x14c] sm:$0xf]
        %v1247 = vld [vmem:[%s2 + $0x150] sm:$0xf]
        %v1248 = vld [vmem:[%s2 + $0x154] sm:$0xf]
        %v1249 = vld [vmem:[%s2 + $0x158] sm:$0xf]
        %v1250 = vld [vmem:[%s2 + $0x15c] sm:$0xf]
        %v1251 = vld [vmem:[%s2 + $0x160] sm:$0xf]
        %v1252 = vld [vmem:[%s2 + $0x164] sm:$0xf]
        %v1253 = vld [vmem:[%s2 + $0x168] sm:$0xf]
        %v1254 = vld [vmem:[%s2 + $0x16c] sm:$0xf]
        %v1255 = vld [vmem:[%s2 + $0x170] sm:$0xf]
        %v1256 = vld [vmem:[%s2 + $0x174] sm:$0xf]
        %v1257 = vld [vmem:[%s2 + $0x178] sm:$0xf]
        %v1258 = vld [vmem:[%s2 + $0x17c] sm:$0xf]
        %v1259 = vld [vmem:[%s2 + $0x180] sm:$0xf]
        %v1260 = vld [vmem:[%s2 + $0x184] sm:$0xf]
        %v1261 = vld [vmem:[%s2 + $0x188] sm:$0xf]
        %v1262 = vld [vmem:[%s2 + $0x18c] sm:$0xf]
        %v1263 = vld [vmem:[%s2 + $0x190] sm:$0xf]
        %v1264 = vld [vmem:[%s2 + $0x194] sm:$0xf]
        %v1265 = vld [vmem:[%s2 + $0x198] sm:$0xf]
        %v1266 = vld [vmem:[%s2 + $0x19c] sm:$0xf]
        %v1267 = vld [vmem:[%s2 + $0x1a0] sm:$0xf]
        %v1268 = vld [vmem:[%s2 + $0x1a4] sm:$0xf]
        %v1269 = vld [vmem:[%s2 + $0x1a8] sm:$0xf]
        %v1270 = vld [vmem:[%s2 + $0x1ac] sm:$0xf]
        %v1271 = vld [vmem:[%s2 + $0x1b0] sm:$0xf]
        %v1272 = vld [vmem:[%s2 + $0x1b4] sm:$0xf]
        %v1273 = vld [vmem:[%s2 + $0x1b8] sm:$0xf]
        %v1274 = vld [vmem:[%s2 + $0x1bc] sm:$0xf]
        %v1275 = vld [vmem:[%s2 + $0x1c0] sm:$0xf]
        %v1276 = vld [vmem:[%s2 + $0x1c4] sm:$0xf]
        %v1277 = vld [vmem:[%s2 + $0x1c8] sm:$0xf]
        %v1278 = vld [vmem:[%s2 + $0x1cc] sm:$0xf]
        %v1279 = vld [vmem:[%s2 + $0x1d0] sm:$0xf]
        %v1280 = vld [vmem:[%s2 + $0x1d4] sm:$0xf]
        %v1281 = vld [vmem:[%s2 + $0x1d8] sm:$0xf]
        %v1282 = vld [vmem:[%s2 + $0x1dc] sm:$0xf]
        %v1283 = vld [vmem:[%s2 + $0x1e0] sm:$0xf]
        %v1284 = vld [vmem:[%s2 + $0x1e4] sm:$0xf]
        %v1285 = vld [vmem:[%s2 + $0x1e8] sm:$0xf]
        %v1286 = vld [vmem:[%s2 + $0x1ec] sm:$0xf]
        %v1287 = vld [vmem:[%s2 + $0x1f0] sm:$0xf]
        %v1288 = vld [vmem:[%s2 + $0x1f4] sm:$0xf]
        %v1289 = vld [vmem:[%s2 + $0x1f8] sm:$0xf]
        %v1290 = vld [vmem:[%s2 + $0x1fc] sm:$0xf]
        %v1291 = vld [vmem:[%s2 + $0x200] sm:$0xf]
        %v1292 = vld [vmem:[%s2 + $0x204] sm:$0xf]
        %v1293 = vld [vmem:[%s2 + $0x208] sm:$0xf]
        %v1294 = vld [vmem:[%s2 + $0x20c] sm:$0xf]
        %v1295 = vld [vmem:[%s2 + $0x210] sm:$0xf]
        %v1296 = vld [vmem:[%s2 + $0x214] sm:$0xf]
        %v1297 = vld [vmem:[%s2 + $0x218] sm:$0xf]
        %v1298 = vld [vmem:[%s2 + $0x21c] sm:$0xf]
        %v1299 = vld [vmem:[%s2 + $0x220] sm:$0xf]
        %v1300 = vld [vmem:[%s2 + $0x224] sm:$0xf]
        %v1301 = vld [vmem:[%s2 + $0x228] sm:$0xf]
        %v1302 = vld [vmem:[%s2 + $0x22c] sm:$0xf]
        %v1303 = vld [vmem:[%s2 + $0x230] sm:$0xf]
        %v1304 = vld [vmem:[%s2 + $0x234] sm:$0xf]
        %v1305 = vld [vmem:[%s2 + $0x238] sm:$0xf]
        %v1306 = vld [vmem:[%s2 + $0x23c] sm:$0xf]
        %v1307 = vld [vmem:[%s3] sm:$0x1]
        %v1309 = vperm.slane %v1307, 0
        %v1455 = vunpack.c.l.b16 %v1163
        %v1456 = vunpack.c.l.b16 %v1164
        %v1457 = vunpack.c.l.b16 %v1165
        %v1458 = vunpack.c.l.b16 %v1166
        %v1459 = vunpack.c.l.b16 %v1167
        %v1460 = vunpack.c.l.b16 %v1168
        %v1461 = vunpack.c.l.b16 %v1169
        %v1462 = vunpack.c.l.b16 %v1170
        %v1463 = vunpack.c.l.b16 %v1171
        %v1464 = vunpack.c.l.b16 %v1172
        %v1465 = vunpack.c.l.b16 %v1173
        %v1466 = vunpack.c.l.b16 %v1174
        %v1467 = vunpack.c.l.b16 %v1175
        %v1468 = vunpack.c.l.b16 %v1176
        %v1469 = vunpack.c.l.b16 %v1177
        %v1470 = vunpack.c.l.b16 %v1178
        %v1471 = vunpack.c.l.b16 %v1179
        %v1472 = vunpack.c.l.b16 %v1180
        %v1473 = vunpack.c.l.b16 %v1181
        %v1474 = vunpack.c.l.b16 %v1182
        %v1475 = vunpack.c.l.b16 %v1183
        %v1476 = vunpack.c.l.b16 %v1184
        %v1477 = vunpack.c.l.b16 %v1185
        %v1478 = vunpack.c.l.b16 %v1186
        %v1479 = vunpack.c.l.b16 %v1187
        %v1480 = vunpack.c.l.b16 %v1188
        %v1481 = vunpack.c.l.b16 %v1189
        %v1482 = vunpack.c.l.b16 %v1190
        %v1483 = vunpack.c.l.b16 %v1191
        %v1484 = vunpack.c.l.b16 %v1192
        %v1485 = vunpack.c.l.b16 %v1193
        %v1486 = vunpack.c.l.b16 %v1194
        %v1487 = vunpack.c.l.b16 %v1195
        %v1488 = vunpack.c.l.b16 %v1196
        %v1489 = vunpack.c.l.b16 %v1197
        %v1490 = vunpack.c.l.b16 %v1198
        %v1491 = vunpack.c.l.b16 %v1199
        %v1492 = vunpack.c.l.b16 %v1200
        %v1493 = vunpack.c.l.b16 %v1201
        %v1494 = vunpack.c.l.b16 %v1202
        %v1495 = vunpack.c.l.b16 %v1203
        %v1496 = vunpack.c.l.b16 %v1204
        %v1497 = vunpack.c.l.b16 %v1205
        %v1498 = vunpack.c.l.b16 %v1206
        %v1499 = vunpack.c.l.b16 %v1207
        %v1500 = vunpack.c.l.b16 %v1208
        %v1501 = vunpack.c.l.b16 %v1209
        %v1502 = vunpack.c.l.b16 %v1210
        %v1503 = vunpack.c.l.b16 %v1211
        %v1504 = vunpack.c.l.b16 %v1212
        %v1505 = vunpack.c.l.b16 %v1213
        %v1506 = vunpack.c.l.b16 %v1214
        %v1507 = vunpack.c.l.b16 %v1215
        %v1508 = vunpack.c.l.b16 %v1216
        %v1509 = vunpack.c.l.b16 %v1217
        %v1510 = vunpack.c.l.b16 %v1218
        %v1511 = vunpack.c.l.b16 %v1219
        %v1512 = vunpack.c.l.b16 %v1220
        %v1513 = vunpack.c.l.b16 %v1221
        %v1514 = vunpack.c.l.b16 %v1222
        %v1515 = vunpack.c.l.b16 %v1223
        %v1516 = vunpack.c.l.b16 %v1224
        %v1517 = vunpack.c.l.b16 %v1225
        %v1518 = vunpack.c.l.b16 %v1226
        %v1519 = vunpack.c.l.b16 %v1227
        %v1520 = vunpack.c.l.b16 %v1228
        %v1521 = vunpack.c.l.b16 %v1229
        %v1522 = vunpack.c.l.b16 %v1230
        %v1523 = vunpack.c.l.b16 %v1231
        %v1524 = vunpack.c.l.b16 %v1232
        %v1525 = vunpack.c.l.b16 %v1233
        %v1526 = vunpack.c.l.b16 %v1234
        %v1527 = vunpack.c.l.b16 %v1235
        %v1528 = vunpack.c.l.b16 %v1236
        %v1529 = vunpack.c.l.b16 %v1237
        %v1530 = vunpack.c.l.b16 %v1238
        %v1531 = vunpack.c.l.b16 %v1239
        %v1532 = vunpack.c.l.b16 %v1240
        %v1533 = vunpack.c.l.b16 %v1241
        %v1534 = vunpack.c.l.b16 %v1242
        %v1535 = vunpack.c.l.b16 %v1243
        %v1536 = vunpack.c.l.b16 %v1244
        %v1537 = vunpack.c.l.b16 %v1245
        %v1538 = vunpack.c.l.b16 %v1246
        %v1539 = vunpack.c.l.b16 %v1247
        %v1540 = vunpack.c.l.b16 %v1248
        %v1541 = vunpack.c.l.b16 %v1249
        %v1542 = vunpack.c.l.b16 %v1250
        %v1543 = vunpack.c.l.b16 %v1251
        %v1544 = vunpack.c.l.b16 %v1252
        %v1545 = vunpack.c.l.b16 %v1253
        %v1546 = vunpack.c.l.b16 %v1254
        %v1547 = vunpack.c.l.b16 %v1255
        %v1548 = vunpack.c.l.b16 %v1256
        %v1549 = vunpack.c.l.b16 %v1257
        %v1550 = vunpack.c.l.b16 %v1258
        %v1551 = vunpack.c.l.b16 %v1259
        %v1552 = vunpack.c.l.b16 %v1260
        %v1553 = vunpack.c.l.b16 %v1261
        %v1554 = vunpack.c.l.b16 %v1262
        %v1555 = vunpack.c.l.b16 %v1263
        %v1556 = vunpack.c.l.b16 %v1264
        %v1557 = vunpack.c.l.b16 %v1265
        %v1558 = vunpack.c.l.b16 %v1266
        %v1559 = vunpack.c.l.b16 %v1267
        %v1560 = vunpack.c.l.b16 %v1268
        %v1561 = vunpack.c.l.b16 %v1269
        %v1562 = vunpack.c.l.b16 %v1270
        %v1563 = vunpack.c.l.b16 %v1271
        %v1564 = vunpack.c.l.b16 %v1272
        %v1565 = vunpack.c.l.b16 %v1273
        %v1566 = vunpack.c.l.b16 %v1274
        %v1567 = vunpack.c.l.b16 %v1275
        %v1568 = vunpack.c.l.b16 %v1276
        %v1569 = vunpack.c.l.b16 %v1277
        %v1570 = vunpack.c.l.b16 %v1278
        %v1571 = vunpack.c.l.b16 %v1279
        %v1572 = vunpack.c.l.b16 %v1280
        %v1573 = vunpack.c.l.b16 %v1281
        %v1574 = vunpack.c.l.b16 %v1282
        %v1575 = vunpack.c.l.b16 %v1283
        %v1576 = vunpack.c.l.b16 %v1284
        %v1577 = vunpack.c.l.b16 %v1285
        %v1578 = vunpack.c.l.b16 %v1286
        %v1579 = vunpack.c.l.b16 %v1287
        %v1580 = vunpack.c.l.b16 %v1288
        %v1581 = vunpack.c.l.b16 %v1289
        %v1582 = vunpack.c.l.b16 %v1290
        %v1583 = vunpack.c.l.b16 %v1291
        %v1584 = vunpack.c.l.b16 %v1292
        %v1585 = vunpack.c.l.b16 %v1293
        %v1586 = vunpack.c.l.b16 %v1294
        %v1587 = vunpack.c.l.b16 %v1295
        %v1588 = vunpack.c.l.b16 %v1296
        %v1589 = vunpack.c.l.b16 %v1297
        %v1590 = vunpack.c.l.b16 %v1298
        %v1591 = vunpack.c.l.b16 %v1299
        %v1592 = vunpack.c.l.b16 %v1300
        %v1593 = vunpack.c.l.b16 %v1301
        %v1594 = vunpack.c.l.b16 %v1302
        %v1595 = vunpack.c.l.b16 %v1303
        %v1596 = vunpack.c.l.b16 %v1304
        %v1597 = vunpack.c.l.b16 %v1305
        %v1598 = vunpack.c.l.b16 %v1306
        %v1599 = vpack.c.b16 %v1456, %v1455
        %v1600 = vpack.c.b16 %v1458, %v1457
        %v1601 = vpack.c.b16 %v1460, %v1459
        %v1602 = vpack.c.b16 %v1462, %v1461
        %v1603 = vpack.c.b16 %v1464, %v1463
        %v1604 = vpack.c.b16 %v1466, %v1465
        %v1605 = vpack.c.b16 %v1468, %v1467
        %v1606 = vpack.c.b16 %v1470, %v1469
        %v1607 = vpack.c.b16 %v1472, %v1471
        %v1608 = vpack.c.b16 %v1474, %v1473
        %v1609 = vpack.c.b16 %v1476, %v1475
        %v1610 = vpack.c.b16 %v1478, %v1477
        %v1611 = vpack.c.b16 %v1480, %v1479
        %v1612 = vpack.c.b16 %v1482, %v1481
        %v1613 = vpack.c.b16 %v1484, %v1483
        %v1614 = vpack.c.b16 %v1486, %v1485
        %v1615 = vpack.c.b16 %v1488, %v1487
        %v1616 = vpack.c.b16 %v1490, %v1489
        %v1617 = vpack.c.b16 %v1492, %v1491
        %v1618 = vpack.c.b16 %v1494, %v1493
        %v1619 = vpack.c.b16 %v1496, %v1495
        %v1620 = vpack.c.b16 %v1498, %v1497
        %v1621 = vpack.c.b16 %v1500, %v1499
        %v1622 = vpack.c.b16 %v1502, %v1501
        %v1623 = vpack.c.b16 %v1504, %v1503
        %v1624 = vpack.c.b16 %v1506, %v1505
        %v1625 = vpack.c.b16 %v1508, %v1507
        %v1626 = vpack.c.b16 %v1510, %v1509
        %v1627 = vpack.c.b16 %v1512, %v1511
        %v1628 = vpack.c.b16 %v1514, %v1513
        %v1629 = vpack.c.b16 %v1516, %v1515
        %v1630 = vpack.c.b16 %v1518, %v1517
        %v1631 = vpack.c.b16 %v1520, %v1519
        %v1632 = vpack.c.b16 %v1522, %v1521
        %v1633 = vpack.c.b16 %v1524, %v1523
        %v1634 = vpack.c.b16 %v1526, %v1525
        %v1635 = vpack.c.b16 %v1528, %v1527
        %v1636 = vpack.c.b16 %v1530, %v1529
        %v1637 = vpack.c.b16 %v1532, %v1531
        %v1638 = vpack.c.b16 %v1534, %v1533
        %v1639 = vpack.c.b16 %v1536, %v1535
        %v1640 = vpack.c.b16 %v1538, %v1537
        %v1641 = vpack.c.b16 %v1540, %v1539
        %v1642 = vpack.c.b16 %v1542, %v1541
        %v1643 = vpack.c.b16 %v1544, %v1543
        %v1644 = vpack.c.b16 %v1546, %v1545
        %v1645 = vpack.c.b16 %v1548, %v1547
        %v1646 = vpack.c.b16 %v1550, %v1549
        %v1647 = vpack.c.b16 %v1552, %v1551
        %v1648 = vpack.c.b16 %v1554, %v1553
        %v1649 = vpack.c.b16 %v1556, %v1555
        %v1650 = vpack.c.b16 %v1558, %v1557
        %v1651 = vpack.c.b16 %v1560, %v1559
        %v1652 = vpack.c.b16 %v1562, %v1561
        %v1653 = vpack.c.b16 %v1564, %v1563
        %v1654 = vpack.c.b16 %v1566, %v1565
        %v1655 = vpack.c.b16 %v1568, %v1567
        %v1656 = vpack.c.b16 %v1570, %v1569
        %v1657 = vpack.c.b16 %v1572, %v1571
        %v1658 = vpack.c.b16 %v1574, %v1573
        %v1659 = vpack.c.b16 %v1576, %v1575
        %v1660 = vpack.c.b16 %v1578, %v1577
        %v1661 = vpack.c.b16 %v1580, %v1579
        %v1662 = vpack.c.b16 %v1582, %v1581
        %v1663 = vpack.c.b16 %v1584, %v1583
        %v1664 = vpack.c.b16 %v1586, %v1585
        %v1665 = vpack.c.b16 %v1588, %v1587
        %v1666 = vpack.c.b16 %v1590, %v1589
        %v1667 = vpack.c.b16 %v1592, %v1591
        %v1668 = vpack.c.b16 %v1594, %v1593
        %v1669 = vpack.c.b16 %v1596, %v1595
        %v1670 = vpack.c.b16 %v1598, %v1597
        %1743 = vmatpush.bf16.msra.mxu0 %v1606
        %1744 = vmatpush.bf16.msra.mxu0 %v1605
        %1745 = vmatpush.bf16.msra.mxu0 %v1604
        %1746 = vmatpush.bf16.msra.mxu0 %v1603
        %1747 = vmatpush.bf16.msra.mxu0 %v1602
        %1748 = vmatpush.bf16.msra.mxu0 %v1601
        %1749 = vmatpush.bf16.msra.mxu0 %v1600
        %1750 = vmatpush.bf16.msra.mxu0 %v1599
        %1751 = vmatmul.bf16.gmra.mxu0 %v987
        %v1752 = vpop.f32.mrf.mxu0
        %v1753 = vadd.f32 %v1309, %v1752
        %v1754 = vpop.f32.mrf.mxu0
        %v1755 = vadd.f32 %v1309, %v1754
        %1756 = vmatmul.bf16.gmra.mxu0 %v988
        %v1757 = vpop.f32.mrf.mxu0
        %v1758 = vadd.f32 %v1309, %v1757
        %v1759 = vpop.f32.mrf.mxu0
        %v1760 = vadd.f32 %v1309, %v1759
        %1761 = vmatmul.bf16.gmra.mxu0 %v989
        %v1762 = vpop.f32.mrf.mxu0
        %v1763 = vadd.f32 %v1309, %v1762
        %v1764 = vpop.f32.mrf.mxu0
        %v1765 = vadd.f32 %v1309, %v1764
        %1766 = vmatmul.bf16.gmra.mxu0 %v990
        %v1767 = vpop.f32.mrf.mxu0
        %v1768 = vadd.f32 %v1309, %v1767
        %v1769 = vpop.f32.mrf.mxu0
        %v1770 = vadd.f32 %v1309, %v1769
        %1771 = vdwg.mxu0
        %1772 = vmatpush.bf16.msra.mxu0 %v1614
        %1773 = vmatpush.bf16.msra.mxu0 %v1613
        %1774 = vmatpush.bf16.msra.mxu0 %v1612
        %1775 = vmatpush.bf16.msra.mxu0 %v1611
        %1776 = vmatpush.bf16.msra.mxu0 %v1610
        %1777 = vmatpush.bf16.msra.mxu0 %v1609
        %1778 = vmatpush.bf16.msra.mxu0 %v1608
        %1779 = vmatpush.bf16.msra.mxu0 %v1607
        %1780 = vmatmul.bf16.gmra.mxu0 %v1011
        %v1781 = vpop.f32.mrf.mxu0
        %v1782 = vadd.f32 %v1753, %v1781
        %v1783 = vpop.f32.mrf.mxu0
        %v1784 = vadd.f32 %v1755, %v1783
        %1785 = vmatmul.bf16.gmra.mxu0 %v1012
        %v1786 = vpop.f32.mrf.mxu0
        %v1787 = vadd.f32 %v1758, %v1786
        %v1788 = vpop.f32.mrf.mxu0
        %v1789 = vadd.f32 %v1760, %v1788
        %1790 = vmatmul.bf16.gmra.mxu0 %v1013
        %v1791 = vpop.f32.mrf.mxu0
        %v1792 = vadd.f32 %v1763, %v1791
        %v1793 = vpop.f32.mrf.mxu0
        %v1794 = vadd.f32 %v1765, %v1793
        %1795 = vmatmul.bf16.gmra.mxu0 %v1014
        %v1796 = vpop.f32.mrf.mxu0
        %v1797 = vadd.f32 %v1768, %v1796
        %v1798 = vpop.f32.mrf.mxu0
        %v1799 = vadd.f32 %v1770, %v1798
        %1800 = vdwg.mxu0
        %1801 = vmatpush.bf16.msra.mxu0 %v1622
        %1802 = vmatpush.bf16.msra.mxu0 %v1621
        %1803 = vmatpush.bf16.msra.mxu0 %v1620
        %1804 = vmatpush.bf16.msra.mxu0 %v1619
        %1805 = vmatpush.bf16.msra.mxu0 %v1618
        %1806 = vmatpush.bf16.msra.mxu0 %v1617
        %1807 = vmatpush.bf16.msra.mxu0 %v1616
        %1808 = vmatpush.bf16.msra.mxu0 %v1615
        %1809 = vmatmul.bf16.gmra.mxu0 %v1027
        %v1810 = vpop.f32.mrf.mxu0
        %v1811 = vadd.f32 %v1782, %v1810
        %v1812 = vpop.f32.mrf.mxu0
        %v1813 = vadd.f32 %v1784, %v1812
        %1814 = vmatmul.bf16.gmra.mxu0 %v1028
        %v1815 = vpop.f32.mrf.mxu0
        %v1816 = vadd.f32 %v1787, %v1815
        %v1817 = vpop.f32.mrf.mxu0
        %v1818 = vadd.f32 %v1789, %v1817
        %1819 = vmatmul.bf16.gmra.mxu0 %v1029
        %v1820 = vpop.f32.mrf.mxu0
        %v1821 = vadd.f32 %v1792, %v1820
        %v1822 = vpop.f32.mrf.mxu0
        %v1823 = vadd.f32 %v1794, %v1822
        %1824 = vmatmul.bf16.gmra.mxu0 %v1030
        %v1825 = vpop.f32.mrf.mxu0
        %v1826 = vadd.f32 %v1797, %v1825
        %v1827 = vpop.f32.mrf.mxu0
        %v1828 = vadd.f32 %v1799, %v1827
        %1829 = vdwg.mxu0
        %1830 = vmatpush.bf16.msra.mxu0 %v1630
        %1831 = vmatpush.bf16.msra.mxu0 %v1629
        %1832 = vmatpush.bf16.msra.mxu0 %v1628
        %1833 = vmatpush.bf16.msra.mxu0 %v1627
        %1834 = vmatpush.bf16.msra.mxu0 %v1626
        %1835 = vmatpush.bf16.msra.mxu0 %v1625
        %1836 = vmatpush.bf16.msra.mxu0 %v1624
        %1837 = vmatpush.bf16.msra.mxu0 %v1623
        %1838 = vmatmul.bf16.gmra.mxu0 %v1051
        %v1839 = vpop.f32.mrf.mxu0
        %v1840 = vadd.f32 %v1811, %v1839
        %v1841 = vpop.f32.mrf.mxu0
        %v1842 = vadd.f32 %v1813, %v1841
        %1843 = vmatmul.bf16.gmra.mxu0 %v1052
        %v1844 = vpop.f32.mrf.mxu0
        %v1845 = vadd.f32 %v1816, %v1844
        %v1846 = vpop.f32.mrf.mxu0
        %v1847 = vadd.f32 %v1818, %v1846
        %1848 = vmatmul.bf16.gmra.mxu0 %v1053
        %v1849 = vpop.f32.mrf.mxu0
        %v1850 = vadd.f32 %v1821, %v1849
        %v1851 = vpop.f32.mrf.mxu0
        %v1852 = vadd.f32 %v1823, %v1851
        %1853 = vmatmul.bf16.gmra.mxu0 %v1054
        %v1854 = vpop.f32.mrf.mxu0
        %v1855 = vadd.f32 %v1826, %v1854
        %v1856 = vpop.f32.mrf.mxu0
        %v1857 = vadd.f32 %v1828, %v1856
        %1858 = vdwg.mxu0
        %1859 = vmatpush.bf16.msra.mxu0 %v1638
        %1860 = vmatpush.bf16.msra.mxu0 %v1637
        %1861 = vmatpush.bf16.msra.mxu0 %v1636
        %1862 = vmatpush.bf16.msra.mxu0 %v1635
        %1863 = vmatpush.bf16.msra.mxu0 %v1634
        %1864 = vmatpush.bf16.msra.mxu0 %v1633
        %1865 = vmatpush.bf16.msra.mxu0 %v1632
        %1866 = vmatpush.bf16.msra.mxu0 %v1631
        %1867 = vmatmul.bf16.gmra.mxu0 %v1075
        %v1868 = vpop.f32.mrf.mxu0
        %v1869 = vadd.f32 %v1840, %v1868
        %v1870 = vpop.f32.mrf.mxu0
        %v1871 = vadd.f32 %v1842, %v1870
        %1872 = vmatmul.bf16.gmra.mxu0 %v1076
        %v1873 = vpop.f32.mrf.mxu0
        %v1874 = vadd.f32 %v1845, %v1873
        %v1875 = vpop.f32.mrf.mxu0
        %v1876 = vadd.f32 %v1847, %v1875
        %1877 = vmatmul.bf16.gmra.mxu0 %v1077
        %v1878 = vpop.f32.mrf.mxu0
        %v1879 = vadd.f32 %v1850, %v1878
        %v1880 = vpop.f32.mrf.mxu0
        %v1881 = vadd.f32 %v1852, %v1880
        %1882 = vmatmul.bf16.gmra.mxu0 %v1078
        %v1883 = vpop.f32.mrf.mxu0
        %v1884 = vadd.f32 %v1855, %v1883
        %v1885 = vpop.f32.mrf.mxu0
        %v1886 = vadd.f32 %v1857, %v1885
        %1887 = vdwg.mxu0
        %1888 = vmatpush.bf16.msra.mxu0 %v1646
        %1889 = vmatpush.bf16.msra.mxu0 %v1645
        %1890 = vmatpush.bf16.msra.mxu0 %v1644
        %1891 = vmatpush.bf16.msra.mxu0 %v1643
        %1892 = vmatpush.bf16.msra.mxu0 %v1642
        %1893 = vmatpush.bf16.msra.mxu0 %v1641
        %1894 = vmatpush.bf16.msra.mxu0 %v1640
        %1895 = vmatpush.bf16.msra.mxu0 %v1639
        %1896 = vmatmul.bf16.gmra.mxu0 %v1091
        %v1897 = vpop.f32.mrf.mxu0
        %v1898 = vadd.f32 %v1869, %v1897
        %v1899 = vpop.f32.mrf.mxu0
        %v1900 = vadd.f32 %v1871, %v1899
        %1901 = vmatmul.bf16.gmra.mxu0 %v1092
        %v1902 = vpop.f32.mrf.mxu0
        %v1903 = vadd.f32 %v1874, %v1902
        %v1904 = vpop.f32.mrf.mxu0
        %v1905 = vadd.f32 %v1876, %v1904
        %1906 = vmatmul.bf16.gmra.mxu0 %v1093
        %v1907 = vpop.f32.mrf.mxu0
        %v1908 = vadd.f32 %v1879, %v1907
        %v1909 = vpop.f32.mrf.mxu0
        %v1910 = vadd.f32 %v1881, %v1909
        %1911 = vmatmul.bf16.gmra.mxu0 %v1094
        %v1912 = vpop.f32.mrf.mxu0
        %v1913 = vadd.f32 %v1884, %v1912
        %v1914 = vpop.f32.mrf.mxu0
        %v1915 = vadd.f32 %v1886, %v1914
        %1916 = vdwg.mxu0
        %1917 = vmatpush.bf16.msra.mxu0 %v1654
        %1918 = vmatpush.bf16.msra.mxu0 %v1653
        %1919 = vmatpush.bf16.msra.mxu0 %v1652
        %1920 = vmatpush.bf16.msra.mxu0 %v1651
        %1921 = vmatpush.bf16.msra.mxu0 %v1650
        %1922 = vmatpush.bf16.msra.mxu0 %v1649
        %1923 = vmatpush.bf16.msra.mxu0 %v1648
        %1924 = vmatpush.bf16.msra.mxu0 %v1647
        %1925 = vmatmul.bf16.gmra.mxu0 %v1115
        %v1926 = vpop.f32.mrf.mxu0
        %v1927 = vadd.f32 %v1898, %v1926
        %v1928 = vpop.f32.mrf.mxu0
        %v1929 = vadd.f32 %v1900, %v1928
        %1930 = vmatmul.bf16.gmra.mxu0 %v1116
        %v1931 = vpop.f32.mrf.mxu0
        %v1932 = vadd.f32 %v1903, %v1931
        %v1933 = vpop.f32.mrf.mxu0
        %v1934 = vadd.f32 %v1905, %v1933
        %1935 = vmatmul.bf16.gmra.mxu0 %v1117
        %v1936 = vpop.f32.mrf.mxu0
        %v1937 = vadd.f32 %v1908, %v1936
        %v1938 = vpop.f32.mrf.mxu0
        %v1939 = vadd.f32 %v1910, %v1938
        %1940 = vmatmul.bf16.gmra.mxu0 %v1118
        %v1941 = vpop.f32.mrf.mxu0
        %v1942 = vadd.f32 %v1913, %v1941
        %v1943 = vpop.f32.mrf.mxu0
        %v1944 = vadd.f32 %v1915, %v1943
        %1945 = vdwg.mxu0
        %1946 = vmatpush.bf16.msra.mxu0 %v1662
        %1947 = vmatpush.bf16.msra.mxu0 %v1661
        %1948 = vmatpush.bf16.msra.mxu0 %v1660
        %1949 = vmatpush.bf16.msra.mxu0 %v1659
        %1950 = vmatpush.bf16.msra.mxu0 %v1658
        %1951 = vmatpush.bf16.msra.mxu0 %v1657
        %1952 = vmatpush.bf16.msra.mxu0 %v1656
        %1953 = vmatpush.bf16.msra.mxu0 %v1655
        %1954 = vmatmul.bf16.gmra.mxu0 %v1139
        %v1955 = vpop.f32.mrf.mxu0
        %v1956 = vadd.f32 %v1927, %v1955
        %v1957 = vpop.f32.mrf.mxu0
        %v1958 = vadd.f32 %v1929, %v1957
        %1959 = vmatmul.bf16.gmra.mxu0 %v1140
        %v1960 = vpop.f32.mrf.mxu0
        %v1961 = vadd.f32 %v1932, %v1960
        %v1962 = vpop.f32.mrf.mxu0
        %v1963 = vadd.f32 %v1934, %v1962
        %1964 = vmatmul.bf16.gmra.mxu0 %v1141
        %v1965 = vpop.f32.mrf.mxu0
        %v1966 = vadd.f32 %v1937, %v1965
        %v1967 = vpop.f32.mrf.mxu0
        %v1968 = vadd.f32 %v1939, %v1967
        %1969 = vmatmul.bf16.gmra.mxu0 %v1142
        %v1970 = vpop.f32.mrf.mxu0
        %v1971 = vadd.f32 %v1942, %v1970
        %v1972 = vpop.f32.mrf.mxu0
        %v1973 = vadd.f32 %v1944, %v1972
        %1974 = vdwg.mxu0
        %1975 = vmatpush.bf16.msra.mxu0 %v1670
        %1976 = vmatpush.bf16.msra.mxu0 %v1669
        %1977 = vmatpush.bf16.msra.mxu0 %v1668
        %1978 = vmatpush.bf16.msra.mxu0 %v1667
        %1979 = vmatpush.bf16.msra.mxu0 %v1666
        %1980 = vmatpush.bf16.msra.mxu0 %v1665
        %1981 = vmatpush.bf16.msra.mxu0 %v1664
        %1982 = vmatpush.bf16.msra.mxu0 %v1663
        %1983 = vmatmul.bf16.gmra.mxu0 %v1155
        %v1984 = vpop.f32.mrf.mxu0
        %v1985 = vadd.f32 %v1956, %v1984
        %v1986 = vpop.f32.mrf.mxu0
        %v1987 = vadd.f32 %v1958, %v1986
        %1988 = vmatmul.bf16.gmra.mxu0 %v1156
        %v1989 = vpop.f32.mrf.mxu0
        %v1990 = vadd.f32 %v1961, %v1989
        %v1991 = vpop.f32.mrf.mxu0
        %v1992 = vadd.f32 %v1963, %v1991
        %1993 = vmatmul.bf16.gmra.mxu0 %v1157
        %v1994 = vpop.f32.mrf.mxu0
        %v1995 = vadd.f32 %v1966, %v1994
        %v1996 = vpop.f32.mrf.mxu0
        %v1997 = vadd.f32 %v1968, %v1996
        %1998 = vmatmul.bf16.gmra.mxu0 %v1158
        %v1999 = vpop.f32.mrf.mxu0
        %v2000 = vadd.f32 %v1971, %v1999
        %v2001 = vpop.f32.mrf.mxu0
        %v2002 = vadd.f32 %v1973, %v2001
        %2003 = vdwg.mxu0
        %2004 = vst [vmem:[%s552] sm:$0xff] %v1985
        %2005 = vst [vmem:[%s552 + $0x8] sm:$0xff] %v1987
        %2006 = vst [vmem:[%s552 + $0x10] sm:$0xff] %v1990
        %2007 = vst [vmem:[%s552 + $0x18] sm:$0xff] %v1992
        %2008 = vst [vmem:[%s552 + $0x20] sm:$0xff] %v1995
        %2009 = vst [vmem:[%s552 + $0x28] sm:$0xff] %v1997
        %2010 = vst [vmem:[%s552 + $0x30] sm:$0xff] %v2000
        %2011 = vst [vmem:[%s552 + $0x38] sm:$0xff] %v2002
        %s2012 = smul.u32 8, %s20
        %p2013 = scmp.lt.s32.totalorder %s19, 1
        %s2014 = scalar_select %p2013, %s19, 1
        %p2015 = scmp.lt.s32.totalorder %s2012, 7
        %s2016 = scalar_select %p2015, %s2012, 7
        %s2017 = smul.addr %s2014, 8
        %s2018 = sadd.s32 %s2016, %s2017
        %s2019 = smul.addr %s2018, 8
        %s2020 = scalar_lea.vmem %s4, %s2019
        // Predicated region
        $region99: #{downsample_forward.1} parent=93 // pred_check
          %p2021 = pneg %p145
        $region100: #{downsample_forward.1} parent=93 // pred_check_branch
          %2023 = sbr.rel (%p2021) target = $region102
        $region101: #{downsample_forward.1} parent=93 // pred_region
          %s2024 = smul.u32 8, %s20
        $region102: #{downsample_forward.1} parent=93 // pred_fallthru
          _
      $region94: #{downsample_forward.1} parent=5 // pred_fallthru
        _
      %p2025 = scmp.le.s32.totalorder 2, %s10
      // Predicated region
      $region103: #{downsample_forward.1} parent=5 // pred_check
        %p2026 = pneg %p2025
      $region104: #{downsample_forward.1} parent=5 // pred_check_branch
        %2028 = sbr.rel (%p2026) target = $region106
      $region105: #{downsample_forward.1} parent=5 // pred_region
        %s2029 = ssub.s32 %s10, 2
        // Predicated region
        $region107: #{downsample_forward.1} parent=105 // pred_check
          %p2030 = pneg %p151
        $region108: #{downsample_forward.1} parent=105 // pred_check_branch
          %2032 = sbr.rel (%p2030) target = $region110
        $region109: #{downsample_forward.1} parent=105 // pred_region
          %s2033 = smul.u32 8, %s22
          %p2034 = scmp.lt.s32.totalorder %s21, 1
          %s2035 = scalar_select %p2034, %s21, 1
          %p2036 = scmp.lt.s32.totalorder %s2033, 7
          %s2037 = scalar_select %p2036, %s2033, 7
          %s2038 = smul.addr %s2035, 8
          %s2039 = sadd.s32 %s2037, %s2038
          %s2040 = smul.addr %s2039, 8
          %s2041 = scalar_lea.vmem %s4, %s2040
        $region110: #{downsample_forward.1} parent=105 // pred_fallthru
          _
      $region106: #{downsample_forward.1} parent=5 // pred_fallthru
        _
    $region6: #{downsample_forward.1} parent=1 // loop_footer
      %s14 = sadd.s32 1, %s10
    $region7: #{downsample_forward.1} parent=1 // loop_footer_branch
      %9 = sbr.rel target = $region3
    $region8: #{downsample_forward.1} parent=1 // loop_exit
      _

</llo_original>
